<compile_context>
chip_gen: v5e
topology: v5e:2x2
jax: 0.10.0
libtpu: 0.0.40
codegen_flags: <defaults>
</compile_context>

<pallas_src>
import functools

import jax
import jax.numpy as jnp
from jax.experimental import pallas as pl
from jax.experimental.pallas import tpu as pltpu


def _layer_norm(x, gamma, beta, eps=1e-6):
    # Annotated-transformer LayerNorm (eps=1e-6), biased variance, f32 math.
    mu = jnp.mean(x, axis=-1, keepdims=True)
    var = jnp.mean((x - mu) ** 2, axis=-1, keepdims=True)
    return (x - mu) * jax.lax.rsqrt(var + eps) * gamma + beta


# dot_general dimension numbers for A @ B.T (contract last dims, no batch).
_TRANS_B = (((1,), (1,)), ((), ()))


def encoder_layer_kernel(
    num_heads, ff_chunk,
    # inputs
    xq_ref, xkv_ref, mask_ref,
    ln1_g, ln1_b, wq, bq, wkv, bkv, wo, bo,
    ln2_g, ln2_b, w1, b1, w2, b2,
    lna_g, lna_b, wd, bd, wu, bu,
    # output
    out_ref,
):
    f32, bf16 = jnp.float32, jnp.bfloat16

    xq = xq_ref[0]            # (TQ, D) f32 — query rows of this grid step
    xkv = xkv_ref[0]          # (S,  D) f32 — full sequence (for K/V)
    m = mask_ref[0]           # (1,  S) f32 — key mask (1 = attend)
    TQ, D = xq.shape
    S = xkv.shape[0]
    H = num_heads
    dk = D // H
    scale = 1.0 / float(dk) ** 0.5

    # ---- sublayer 0: pre-norm multi-head self-attention + residual ----------
    g1, be1 = ln1_g[...], ln1_b[...]
    xnq = _layer_norm(xq, g1, be1).astype(bf16)
    xnk = _layer_norm(xkv, g1, be1).astype(bf16)

    # Fused projections: large contractions over D on the MXU, bf16 operands.
    q = jnp.dot(xnq, wq[...], preferred_element_type=f32) + bq[...]        # (TQ, D)
    kv = jnp.dot(xnk, wkv[...], preferred_element_type=f32) + bkv[...]     # (S, 2D)
    k = kv[:, :D]
    v = kv[:, D:]

    qb = q.astype(bf16)
    kb = k.astype(bf16)
    vb = v.astype(bf16)

    # Key-position mask, computed/broadcast ONCE (hoisted out of the head loop).
    keep = jnp.broadcast_to(m > 0, (TQ, S))

    ctx_heads = []
    for h in range(H):                         # static unroll over heads
        lo = h * dk
        qh = qb[:, lo:lo + dk]
        kh = kb[:, lo:lo + dk]
        vh = vb[:, lo:lo + dk]
        # scores: (TQ, dk) x (S, dk)^T -> (TQ, S), f32 accumulation.
        s = jax.lax.dot_general(qh, kh, _TRANS_B, preferred_element_type=f32)
        s = jnp.where(keep, s * scale, jnp.float32(-1e9))
        mx = jnp.max(s, axis=-1, keepdims=True)
        e = jnp.exp(s - mx)
        p = e * pl.reciprocal(jnp.sum(e, axis=-1, keepdims=True), approx=True)
        ctx_heads.append(jnp.dot(p.astype(bf16), vh, preferred_element_type=f32))
    # Concatenate heads into an (TQ, D) slab -> ONE output projection.
    ctx = jnp.concatenate(ctx_heads, axis=-1).astype(bf16)
    attn = jnp.dot(ctx, wo[...], preferred_element_type=f32) + bo[...]
    h1 = xq + attn             # dropout is identity (inference)

    # ---- sublayer 1: pre-norm position-wise feed-forward + residual ---------
    hn = _layer_norm(h1, ln2_g[...], ln2_b[...]).astype(bf16)
    d_ff = w1.shape[1]
    ff = jnp.zeros((TQ, D), f32)
    for lo in range(0, d_ff, ff_chunk):        # chunk d_ff to bound live ranges
        hi = min(d_ff, lo + ff_chunk)
        a = jnp.dot(hn, w1[:, lo:hi], preferred_element_type=f32) + b1[:, lo:hi]
        a = jnp.maximum(a, 0.0).astype(bf16)
        ff = ff + jnp.dot(a, w2[lo:hi, :], preferred_element_type=f32)
    ff = ff + b2[...]
    h2 = h1 + ff

    # ---- mix adapter: bottleneck adapter of the target domain + residual ----
    an = _layer_norm(h2, lna_g[...], lna_b[...]).astype(bf16)
    a = jnp.dot(an, wd[...], preferred_element_type=f32) + bd[...]
    a = jnp.maximum(a, 0.0).astype(bf16)
    a = jnp.dot(a, wu[...], preferred_element_type=f32) + bu[...]
    out_ref[0] = (h2 + a).astype(out_ref.dtype)


def transformer_encoder_layer_with_mix_adapter(
    x, src_mask, params, *, num_heads, target_domain=0,
    mix_output=False, used_domain_list=None, q_tile=None, ff_chunk=512,
):
    """x: (B, S, D) f32, src_mask: (B, 1, S) f32 (1.0 = attend)."""
    # TODO(synk): MixAdapter source not provided; mix_output=True (averaging
    # over used_domain_list) is not implemented — single target-domain path only.
    assert not mix_output, "only the single target-domain path is implemented"
    B, S, D = x.shape
    assert D % num_heads == 0
    ad = params["adapters"][target_domain]
    bf16 = jnp.bfloat16

    # bf16 weight casts / fusions done ONCE here (not per grid step).
    wq = params["wq"].astype(bf16)
    wkv = jnp.concatenate([params["wk"], params["wv"]], axis=1).astype(bf16)
    bkv = jnp.concatenate([params["bk"], params["bv"]], axis=1)
    weight_args = [
        params["ln1_g"], params["ln1_b"],
        wq, params["bq"], wkv, bkv,
        params["wo"].astype(bf16), params["bo"],
        params["ln2_g"], params["ln2_b"],
        params["w1"].astype(bf16), params["b1"],
        params["w2"].astype(bf16), params["b2"],
        ad["lna_g"], ad["lna_b"],
        ad["wd"].astype(bf16), ad["bd"],
        ad["wu"].astype(bf16), ad["bu"],
    ]

    # Query-tile size: bounds per-step VMEM and gives the grid >B steps.
    if q_tile is None:
        q_tile = 128 if S % 128 == 0 else S
    assert S % q_tile == 0 and (q_tile == S or q_tile % 8 == 0)
    n_qt = S // q_tile

    def full_spec(arr):
        nd = arr.ndim
        return pl.BlockSpec(arr.shape, lambda b, t, _nd=nd: (0,) * _nd)

    in_specs = [
        pl.BlockSpec((1, q_tile, D), lambda b, t: (b, t, 0)),   # x (query tile)
        pl.BlockSpec((1, S, D), lambda b, t: (b, 0, 0)),        # x (full, for K/V)
        pl.BlockSpec((1, 1, S), lambda b, t: (b, 0, 0)),        # src_mask
    ] + [full_spec(w) for w in weight_args]

    # Explicit VMEM budget: weights + activation blocks (double-buffered) plus
    # headroom for in-kernel temporaries, clamped to [32 MiB, 64 MiB].
    def _nbytes(a):
        return int(a.size) * a.dtype.itemsize
    d_ff = params["w1"].shape[1]
    weight_bytes = sum(_nbytes(w) for w in weight_args)
    act_bytes = 4 * (q_tile * D + S * D + S + q_tile * D)
    interm_bytes = 4 * (num_heads * q_tile * S + 2 * S * D
                        + q_tile * max(D, min(ff_chunk, d_ff)) + 4 * q_tile * D)
    vmem_limit = int(min(64 * 2 ** 20,
                         max(32 * 2 ** 20,
                             2 * (weight_bytes + act_bytes) + 2 * interm_bytes)))

    kernel = functools.partial(encoder_layer_kernel, num_heads, ff_chunk)
    return pl.pallas_call(
        kernel,
        out_shape=jax.ShapeDtypeStruct((B, S, D), jnp.float32),
        grid=(B, n_qt),
        in_specs=in_specs,
        out_specs=pl.BlockSpec((1, q_tile, D), lambda b, t: (b, t, 0)),
        compiler_params=pltpu.CompilerParams(
            dimension_semantics=("parallel", "parallel"),
            vmem_limit_bytes=vmem_limit),
    )(x, x, src_mask, *weight_args)


def init_params(key, D, d_ff, adapter_dim, num_domains):
    """Deterministic synthetic parameter init (shapes the module's __init__ implies)."""
    ks = jax.random.split(key, 8)

    def lin(k, fan_in, fan_out):
        return (jax.random.normal(k, (fan_in, fan_out), jnp.float32)
                * (1.0 / jnp.sqrt(jnp.float32(fan_in))))

    params = {
        "ln1_g": jnp.ones((1, D), jnp.float32), "ln1_b": jnp.zeros((1, D), jnp.float32),
        "wq": lin(ks[0], D, D), "bq": jnp.zeros((1, D), jnp.float32),
        "wk": lin(ks[1], D, D), "bk": jnp.zeros((1, D), jnp.float32),
        "wv": lin(ks[2], D, D), "bv": jnp.zeros((1, D), jnp.float32),
        "wo": lin(ks[3], D, D), "bo": jnp.zeros((1, D), jnp.float32),
        "ln2_g": jnp.ones((1, D), jnp.float32), "ln2_b": jnp.zeros((1, D), jnp.float32),
        "w1": lin(ks[4], D, d_ff), "b1": jnp.zeros((1, d_ff), jnp.float32),
        "w2": lin(ks[5], d_ff, D), "b2": jnp.zeros((1, D), jnp.float32),
    }
    adapters = []
    for d in range(num_domains):
        kd, ku = jax.random.split(jax.random.fold_in(key, 1000 + d))
        adapters.append({
            "lna_g": jnp.ones((1, D), jnp.float32),
            "lna_b": jnp.zeros((1, D), jnp.float32),
            "wd": lin(kd, D, adapter_dim),
            "bd": jnp.zeros((1, adapter_dim), jnp.float32),
            "wu": lin(ku, adapter_dim, D),
            "bu": jnp.zeros((1, D), jnp.float32),
        })
    params["adapters"] = adapters
    return params


def reference_forward(x, src_mask, params, *, num_heads, target_domain=0):
    """Pure-JAX f32 reference of the module's forward (eval mode)."""
    def ln(v, g, b, eps=1e-6):
        mu = v.mean(-1, keepdims=True)
        var = ((v - mu) ** 2).mean(-1, keepdims=True)
        return (v - mu) / jnp.sqrt(var + eps) * g + b

    B, S, D = x.shape
    H = num_heads
    dk = D // H
    p = params
    xn = ln(x, p["ln1_g"], p["ln1_b"])
    q = xn @ p["wq"] + p["bq"]
    k = xn @ p["wk"] + p["bk"]
    v = xn @ p["wv"] + p["bv"]

    def split(t):
        return t.reshape(B, S, H, dk).transpose(0, 2, 1, 3)

    qh, kh, vh = split(q), split(k), split(v)
    s = jnp.einsum("bhqd,bhkd->bhqk", qh, kh) / jnp.sqrt(jnp.float32(dk))
    mask = src_mask[:, None, :, :]                      # (B,1,1,S)
    s = jnp.where(mask > 0, s, -1e9)
    pw = jax.nn.softmax(s, axis=-1)
    ctx = jnp.einsum("bhqk,bhkd->bhqd", pw, vh).transpose(0, 2, 1, 3).reshape(B, S, D)
    h1 = x + (ctx @ p["wo"] + p["bo"])

    hn = ln(h1, p["ln2_g"], p["ln2_b"])
    h2 = h1 + (jax.nn.relu(hn @ p["w1"] + p["b1"]) @ p["w2"] + p["b2"])

    ad = p["adapters"][target_domain]
    an = ln(h2, ad["lna_g"], ad["lna_b"])
    return h2 + (jax.nn.relu(an @ ad["wd"] + ad["bd"]) @ ad["wu"] + ad["bu"])


if __name__ == "__main__":
    B, S, D = 2, 16, 128        # batch, seq, feature_size (lane-dense D)
    H, D_FF, D_ADAPT = 4, 256, 64
    NUM_DOMAINS = 2

    key = jax.random.PRNGKey(0)
    kx, kp = jax.random.split(key)

    x = jax.random.normal(kx, (B, S, D), jnp.float32)
    # src_mask: (B, 1, S); second example has the last four key positions masked.
    src_mask = jnp.ones((B, 1, S), jnp.float32).at[1, 0, 12:].set(0.0)

    params = init_params(kp, D, D_FF, D_ADAPT, NUM_DOMAINS)

    out = transformer_encoder_layer_with_mix_adapter(
        x, src_mask, params, num_heads=H, target_domain=0, mix_output=False,
        q_tile=8)                                   # exercise the (B, S//TQ) grid
    jax.block_until_ready(out)

    assert out.shape == (B, S, D) and out.dtype == jnp.float32
    assert bool(jnp.all(jnp.isfinite(out)))

    ref = reference_forward(x, src_mask, params, num_heads=H, target_domain=0)
    err = float(jnp.max(jnp.abs(out - ref)))
    scale = float(jnp.max(jnp.abs(ref))) + 1e-6
    assert err / scale < 5e-2, f"relative error too large: {err / scale:.4f}"

    print("KERNEL_OK")
</pallas_src>

<mosaic_0001>
module attributes {stable_mosaic.version = 11 : i64} {
  func.func @encoder_layer_kernel(%arg0: i32, %arg1: i32, %arg2: memref<1x8x128xf32, #tpu.memory_space<vmem>>, %arg3: memref<1x16x128xf32, #tpu.memory_space<vmem>>, %arg4: memref<1x1x16xf32, #tpu.memory_space<vmem>>, %arg5: memref<1x128xf32, #tpu.memory_space<vmem>>, %arg6: memref<1x128xf32, #tpu.memory_space<vmem>>, %arg7: memref<128x128xbf16, #tpu.memory_space<vmem>>, %arg8: memref<1x128xf32, #tpu.memory_space<vmem>>, %arg9: memref<128x256xbf16, #tpu.memory_space<vmem>>, %arg10: memref<1x256xf32, #tpu.memory_space<vmem>>, %arg11: memref<128x128xbf16, #tpu.memory_space<vmem>>, %arg12: memref<1x128xf32, #tpu.memory_space<vmem>>, %arg13: memref<1x128xf32, #tpu.memory_space<vmem>>, %arg14: memref<1x128xf32, #tpu.memory_space<vmem>>, %arg15: memref<128x256xbf16, #tpu.memory_space<vmem>>, %arg16: memref<1x256xf32, #tpu.memory_space<vmem>>, %arg17: memref<256x128xbf16, #tpu.memory_space<vmem>>, %arg18: memref<1x128xf32, #tpu.memory_space<vmem>>, %arg19: memref<1x128xf32, #tpu.memory_space<vmem>>, %arg20: memref<1x128xf32, #tpu.memory_space<vmem>>, %arg21: memref<128x64xbf16, #tpu.memory_space<vmem>>, %arg22: memref<1x64xf32, #tpu.memory_space<vmem>>, %arg23: memref<64x128xbf16, #tpu.memory_space<vmem>>, %arg24: memref<1x128xf32, #tpu.memory_space<vmem>>, %arg25: memref<1x8x128xf32, #tpu.memory_space<vmem>>) attributes {dimension_semantics = [#tpu.dimension_semantics<parallel>, #tpu.dimension_semantics<parallel>], iteration_bounds = array<i64: 2, 2>, scalar_prefetch = 0 : i64, scratch_operands = 0 : i64, tpu.core_type = #tpu.core_type<tc>, window_params = [{transform_indices = @transform_0, window_bounds = array<i64: 1, 8, 128>}, {transform_indices = @transform_1, window_bounds = array<i64: 1, 16, 128>}, {transform_indices = @transform_2, window_bounds = array<i64: 1, 1, 16>}, {pipeline_mode = #tpu.pipeline_mode<synchronous>, transform_indices = @transform_3, window_bounds = array<i64: 1, 128>}, {pipeline_mode = #tpu.pipeline_mode<synchronous>, transform_indices = @transform_4, window_bounds = array<i64: 1, 128>}, {pipeline_mode = #tpu.pipeline_mode<synchronous>, transform_indices = @transform_5, window_bounds = array<i64: 128, 128>}, {pipeline_mode = #tpu.pipeline_mode<synchronous>, transform_indices = @transform_6, window_bounds = array<i64: 1, 128>}, {pipeline_mode = #tpu.pipeline_mode<synchronous>, transform_indices = @transform_7, window_bounds = array<i64: 128, 256>}, {pipeline_mode = #tpu.pipeline_mode<synchronous>, transform_indices = @transform_8, window_bounds = array<i64: 1, 256>}, {pipeline_mode = #tpu.pipeline_mode<synchronous>, transform_indices = @transform_9, window_bounds = array<i64: 128, 128>}, {pipeline_mode = #tpu.pipeline_mode<synchronous>, transform_indices = @transform_10, window_bounds = array<i64: 1, 128>}, {pipeline_mode = #tpu.pipeline_mode<synchronous>, transform_indices = @transform_11, window_bounds = array<i64: 1, 128>}, {pipeline_mode = #tpu.pipeline_mode<synchronous>, transform_indices = @transform_12, window_bounds = array<i64: 1, 128>}, {pipeline_mode = #tpu.pipeline_mode<synchronous>, transform_indices = @transform_13, window_bounds = array<i64: 128, 256>}, {pipeline_mode = #tpu.pipeline_mode<synchronous>, transform_indices = @transform_14, window_bounds = array<i64: 1, 256>}, {pipeline_mode = #tpu.pipeline_mode<synchronous>, transform_indices = @transform_15, window_bounds = array<i64: 256, 128>}, {pipeline_mode = #tpu.pipeline_mode<synchronous>, transform_indices = @transform_16, window_bounds = array<i64: 1, 128>}, {pipeline_mode = #tpu.pipeline_mode<synchronous>, transform_indices = @transform_17, window_bounds = array<i64: 1, 128>}, {pipeline_mode = #tpu.pipeline_mode<synchronous>, transform_indices = @transform_18, window_bounds = array<i64: 1, 128>}, {pipeline_mode = #tpu.pipeline_mode<synchronous>, transform_indices = @transform_19, window_bounds = array<i64: 128, 64>}, {pipeline_mode = #tpu.pipeline_mode<synchronous>, transform_indices = @transform_20, window_bounds = array<i64: 1, 64>}, {pipeline_mode = #tpu.pipeline_mode<synchronous>, transform_indices = @transform_21, window_bounds = array<i64: 64, 128>}, {pipeline_mode = #tpu.pipeline_mode<synchronous>, transform_indices = @transform_22, window_bounds = array<i64: 1, 128>}, {transform_indices = @transform_23, window_bounds = array<i64: 1, 8, 128>}]} {
    %c0 = arith.constant 0 : index
    %c0_0 = arith.constant 0 : index
    %c0_1 = arith.constant 0 : index
    %0 = vector.load %arg2[%c0, %c0_0, %c0_1] : memref<1x8x128xf32, #tpu.memory_space<vmem>>, vector<1x8x128xf32>
    %1 = vector.shape_cast %0 : vector<1x8x128xf32> to vector<8x128xf32>
    %c0_2 = arith.constant 0 : index
    %c0_3 = arith.constant 0 : index
    %c0_4 = arith.constant 0 : index
    %2 = vector.load %arg3[%c0_2, %c0_3, %c0_4] : memref<1x16x128xf32, #tpu.memory_space<vmem>>, vector<1x16x128xf32>
    %3 = vector.shape_cast %2 : vector<1x16x128xf32> to vector<16x128xf32>
    %c0_5 = arith.constant 0 : index
    %c0_6 = arith.constant 0 : index
    %c0_7 = arith.constant 0 : index
    %4 = vector.load %arg4[%c0_5, %c0_6, %c0_7] : memref<1x1x16xf32, #tpu.memory_space<vmem>>, vector<1x1x16xf32>
    %5 = vector.shape_cast %4 : vector<1x1x16xf32> to vector<1x16xf32>
    %c0_8 = arith.constant 0 : index
    %c0_9 = arith.constant 0 : index
    %6 = vector.load %arg5[%c0_8, %c0_9] : memref<1x128xf32, #tpu.memory_space<vmem>>, vector<1x128xf32>
    %c0_10 = arith.constant 0 : index
    %c0_11 = arith.constant 0 : index
    %7 = vector.load %arg6[%c0_10, %c0_11] : memref<1x128xf32, #tpu.memory_space<vmem>>, vector<1x128xf32>
    %cst = arith.constant dense<0.000000e+00> : vector<8xf32>
    %8 = vector.multi_reduction <add>, %1, %cst [1] : vector<8x128xf32> to vector<8xf32>
    %9 = vector.shape_cast %8 : vector<8xf32> to vector<8x1xf32>
    %cst_12 = arith.constant 1.280000e+02 : f32
    %10 = vector.broadcast %cst_12 : f32 to vector<8x1xf32>
    %11 = arith.divf %9, %10 : vector<8x1xf32>
    %12 = vector.broadcast %11 : vector<8x1xf32> to vector<8x128xf32>
    %13 = arith.subf %1, %12 : vector<8x128xf32>
    %14 = arith.mulf %13, %13 : vector<8x128xf32>
    %cst_13 = arith.constant dense<0.000000e+00> : vector<8xf32>
    %15 = vector.multi_reduction <add>, %14, %cst_13 [1] : vector<8x128xf32> to vector<8xf32>
    %16 = vector.shape_cast %15 : vector<8xf32> to vector<8x1xf32>
    %cst_14 = arith.constant 1.280000e+02 : f32
    %17 = vector.broadcast %cst_14 : f32 to vector<8x1xf32>
    %18 = arith.divf %16, %17 : vector<8x1xf32>
    %19 = vector.broadcast %11 : vector<8x1xf32> to vector<8x128xf32>
    %20 = arith.subf %1, %19 : vector<8x128xf32>
    %cst_15 = arith.constant 9.99999997E-7 : f32
    %21 = vector.broadcast %cst_15 : f32 to vector<8x1xf32>
    %22 = arith.addf %18, %21 : vector<8x1xf32>
    %23 = math.rsqrt %22 : vector<8x1xf32>
    %24 = vector.broadcast %23 : vector<8x1xf32> to vector<8x128xf32>
    %25 = arith.mulf %20, %24 : vector<8x128xf32>
    %26 = vector.broadcast %6 : vector<1x128xf32> to vector<8x128xf32>
    %27 = arith.mulf %25, %26 : vector<8x128xf32>
    %28 = vector.broadcast %7 : vector<1x128xf32> to vector<8x128xf32>
    %29 = arith.addf %27, %28 : vector<8x128xf32>
    %30 = arith.truncf %29 : vector<8x128xf32> to vector<8x128xbf16>
    %cst_16 = arith.constant dense<0.000000e+00> : vector<16xf32>
    %31 = vector.multi_reduction <add>, %3, %cst_16 [1] : vector<16x128xf32> to vector<16xf32>
    %32 = vector.shape_cast %31 : vector<16xf32> to vector<16x1xf32>
    %cst_17 = arith.constant 1.280000e+02 : f32
    %33 = vector.broadcast %cst_17 : f32 to vector<16x1xf32>
    %34 = arith.divf %32, %33 : vector<16x1xf32>
    %35 = vector.broadcast %34 : vector<16x1xf32> to vector<16x128xf32>
    %36 = arith.subf %3, %35 : vector<16x128xf32>
    %37 = arith.mulf %36, %36 : vector<16x128xf32>
    %cst_18 = arith.constant dense<0.000000e+00> : vector<16xf32>
    %38 = vector.multi_reduction <add>, %37, %cst_18 [1] : vector<16x128xf32> to vector<16xf32>
    %39 = vector.shape_cast %38 : vector<16xf32> to vector<16x1xf32>
    %cst_19 = arith.constant 1.280000e+02 : f32
    %40 = vector.broadcast %cst_19 : f32 to vector<16x1xf32>
    %41 = arith.divf %39, %40 : vector<16x1xf32>
    %42 = vector.broadcast %34 : vector<16x1xf32> to vector<16x128xf32>
    %43 = arith.subf %3, %42 : vector<16x128xf32>
    %cst_20 = arith.constant 9.99999997E-7 : f32
    %44 = vector.broadcast %cst_20 : f32 to vector<16x1xf32>
    %45 = arith.addf %41, %44 : vector<16x1xf32>
    %46 = math.rsqrt %45 : vector<16x1xf32>
    %47 = vector.broadcast %46 : vector<16x1xf32> to vector<16x128xf32>
    %48 = arith.mulf %43, %47 : vector<16x128xf32>
    %49 = vector.broadcast %6 : vector<1x128xf32> to vector<16x128xf32>
    %50 = arith.mulf %48, %49 : vector<16x128xf32>
    %51 = vector.broadcast %7 : vector<1x128xf32> to vector<16x128xf32>
    %52 = arith.addf %50, %51 : vector<16x128xf32>
    %53 = arith.truncf %52 : vector<16x128xf32> to vector<16x128xbf16>
    %c0_21 = arith.constant 0 : index
    %c0_22 = arith.constant 0 : index
    %54 = vector.load %arg7[%c0_21, %c0_22] : memref<128x128xbf16, #tpu.memory_space<vmem>>, vector<128x128xbf16>
    %cst_23 = arith.constant dense<0.000000e+00> : vector<8x128xf32>
    %55 = tpu.matmul %30, %54, %cst_23 {dimension_numbers = #tpu.dot_dimension_numbers<[1], [0], [0], [1], [0, 0, 1, 1], [], []>} : vector<8x128xbf16>, vector<128x128xbf16>, vector<8x128xf32> -> vector<8x128xf32>
    %c0_24 = arith.constant 0 : index
    %c0_25 = arith.constant 0 : index
    %56 = vector.load %arg8[%c0_24, %c0_25] : memref<1x128xf32, #tpu.memory_space<vmem>>, vector<1x128xf32>
    %57 = vector.broadcast %56 : vector<1x128xf32> to vector<8x128xf32>
    %58 = arith.addf %55, %57 : vector<8x128xf32>
    %c0_26 = arith.constant 0 : index
    %c0_27 = arith.constant 0 : index
    %59 = vector.load %arg9[%c0_26, %c0_27] : memref<128x256xbf16, #tpu.memory_space<vmem>>, vector<128x256xbf16>
    %cst_28 = arith.constant dense<0.000000e+00> : vector<16x256xf32>
    %60 = tpu.matmul %53, %59, %cst_28 {dimension_numbers = #tpu.dot_dimension_numbers<[1], [0], [0], [1], [0, 0, 1, 1], [], []>} : vector<16x128xbf16>, vector<128x256xbf16>, vector<16x256xf32> -> vector<16x256xf32>
    %c0_29 = arith.constant 0 : index
    %c0_30 = arith.constant 0 : index
    %61 = vector.load %arg10[%c0_29, %c0_30] : memref<1x256xf32, #tpu.memory_space<vmem>>, vector<1x256xf32>
    %62 = vector.broadcast %61 : vector<1x256xf32> to vector<16x256xf32>
    %63 = arith.addf %60, %62 : vector<16x256xf32>
    %64 = vector.extract_strided_slice %63 {offsets = [0, 0], sizes = [16, 128], strides = [1, 1]} : vector<16x256xf32> to vector<16x128xf32>
    %65 = vector.extract_strided_slice %63 {offsets = [0, 128], sizes = [16, 128], strides = [1, 1]} : vector<16x256xf32> to vector<16x128xf32>
    %66 = arith.truncf %58 : vector<8x128xf32> to vector<8x128xbf16>
    %67 = arith.truncf %64 : vector<16x128xf32> to vector<16x128xbf16>
    %68 = arith.truncf %65 : vector<16x128xf32> to vector<16x128xbf16>
    %cst_31 = arith.constant 0.000000e+00 : f32
    %69 = vector.broadcast %cst_31 : f32 to vector<1x16xf32>
    %70 = arith.cmpf ogt, %5, %69 : vector<1x16xf32>
    %71 = vector.shape_cast %70 : vector<1x16xi1> to vector<1x16xi1>
    %72 = vector.broadcast %71 : vector<1x16xi1> to vector<8x16xi1>
    %73 = vector.extract_strided_slice %66 {offsets = [0, 0], sizes = [8, 32], strides = [1, 1]} : vector<8x128xbf16> to vector<8x32xbf16>
    %74 = vector.extract_strided_slice %67 {offsets = [0, 0], sizes = [16, 32], strides = [1, 1]} : vector<16x128xbf16> to vector<16x32xbf16>
    %75 = vector.extract_strided_slice %68 {offsets = [0, 0], sizes = [16, 32], strides = [1, 1]} : vector<16x128xbf16> to vector<16x32xbf16>
    %cst_32 = arith.constant dense<0.000000e+00> : vector<8x16xf32>
    %76 = tpu.matmul %73, %74, %cst_32 {dimension_numbers = #tpu.dot_dimension_numbers<[1], [1], [0], [0], [0, 0, 1, 0], [], []>} : vector<8x32xbf16>, vector<16x32xbf16>, vector<8x16xf32> -> vector<8x16xf32>
    %cst_33 = arith.constant 0.176776692 : f32
    %77 = vector.broadcast %cst_33 : f32 to vector<8x16xf32>
    %78 = arith.mulf %76, %77 : vector<8x16xf32>
    %cst_34 = arith.constant -1.000000e+09 : f32
    %79 = vector.broadcast %cst_34 : f32 to vector<8x16xf32>
    %80 = arith.select %72, %78, %79 : vector<8x16xi1>, vector<8x16xf32>
    %cst_35 = arith.constant dense<0xFF800000> : vector<8xf32>
    %81 = vector.multi_reduction <maximumf>, %80, %cst_35 [1] : vector<8x16xf32> to vector<8xf32>
    %82 = vector.shape_cast %81 : vector<8xf32> to vector<8x1xf32>
    %83 = vector.broadcast %82 : vector<8x1xf32> to vector<8x16xf32>
    %84 = arith.subf %80, %83 : vector<8x16xf32>
    %85 = math.exp %84 : vector<8x16xf32>
    %cst_36 = arith.constant dense<0.000000e+00> : vector<8xf32>
    %86 = vector.multi_reduction <add>, %85, %cst_36 [1] : vector<8x16xf32> to vector<8xf32>
    %87 = vector.shape_cast %86 : vector<8xf32> to vector<8x1xf32>
    %88 = tpu.reciprocal %87 {approx = true} : vector<8x1xf32> -> vector<8x1xf32>
    %89 = vector.broadcast %88 : vector<8x1xf32> to vector<8x16xf32>
    %90 = arith.mulf %85, %89 : vector<8x16xf32>
    %91 = arith.truncf %90 : vector<8x16xf32> to vector<8x16xbf16>
    %cst_37 = arith.constant dense<0.000000e+00> : vector<8x32xf32>
    %92 = tpu.matmul %91, %75, %cst_37 {dimension_numbers = #tpu.dot_dimension_numbers<[1], [0], [0], [1], [0, 0, 1, 1], [], []>} : vector<8x16xbf16>, vector<16x32xbf16>, vector<8x32xf32> -> vector<8x32xf32>
    %93 = vector.extract_strided_slice %66 {offsets = [0, 32], sizes = [8, 32], strides = [1, 1]} : vector<8x128xbf16> to vector<8x32xbf16>
    %94 = vector.extract_strided_slice %67 {offsets = [0, 32], sizes = [16, 32], strides = [1, 1]} : vector<16x128xbf16> to vector<16x32xbf16>
    %95 = vector.extract_strided_slice %68 {offsets = [0, 32], sizes = [16, 32], strides = [1, 1]} : vector<16x128xbf16> to vector<16x32xbf16>
    %cst_38 = arith.constant dense<0.000000e+00> : vector<8x16xf32>
    %96 = tpu.matmul %93, %94, %cst_38 {dimension_numbers = #tpu.dot_dimension_numbers<[1], [1], [0], [0], [0, 0, 1, 0], [], []>} : vector<8x32xbf16>, vector<16x32xbf16>, vector<8x16xf32> -> vector<8x16xf32>
    %cst_39 = arith.constant 0.176776692 : f32
    %97 = vector.broadcast %cst_39 : f32 to vector<8x16xf32>
    %98 = arith.mulf %96, %97 : vector<8x16xf32>
    %cst_40 = arith.constant -1.000000e+09 : f32
    %99 = vector.broadcast %cst_40 : f32 to vector<8x16xf32>
    %100 = arith.select %72, %98, %99 : vector<8x16xi1>, vector<8x16xf32>
    %cst_41 = arith.constant dense<0xFF800000> : vector<8xf32>
    %101 = vector.multi_reduction <maximumf>, %100, %cst_41 [1] : vector<8x16xf32> to vector<8xf32>
    %102 = vector.shape_cast %101 : vector<8xf32> to vector<8x1xf32>
    %103 = vector.broadcast %102 : vector<8x1xf32> to vector<8x16xf32>
    %104 = arith.subf %100, %103 : vector<8x16xf32>
    %105 = math.exp %104 : vector<8x16xf32>
    %cst_42 = arith.constant dense<0.000000e+00> : vector<8xf32>
    %106 = vector.multi_reduction <add>, %105, %cst_42 [1] : vector<8x16xf32> to vector<8xf32>
    %107 = vector.shape_cast %106 : vector<8xf32> to vector<8x1xf32>
    %108 = tpu.reciprocal %107 {approx = true} : vector<8x1xf32> -> vector<8x1xf32>
    %109 = vector.broadcast %108 : vector<8x1xf32> to vector<8x16xf32>
    %110 = arith.mulf %105, %109 : vector<8x16xf32>
    %111 = arith.truncf %110 : vector<8x16xf32> to vector<8x16xbf16>
    %cst_43 = arith.constant dense<0.000000e+00> : vector<8x32xf32>
    %112 = tpu.matmul %111, %95, %cst_43 {dimension_numbers = #tpu.dot_dimension_numbers<[1], [0], [0], [1], [0, 0, 1, 1], [], []>} : vector<8x16xbf16>, vector<16x32xbf16>, vector<8x32xf32> -> vector<8x32xf32>
    %113 = vector.extract_strided_slice %66 {offsets = [0, 64], sizes = [8, 32], strides = [1, 1]} : vector<8x128xbf16> to vector<8x32xbf16>
    %114 = vector.extract_strided_slice %67 {offsets = [0, 64], sizes = [16, 32], strides = [1, 1]} : vector<16x128xbf16> to vector<16x32xbf16>
    %115 = vector.extract_strided_slice %68 {offsets = [0, 64], sizes = [16, 32], strides = [1, 1]} : vector<16x128xbf16> to vector<16x32xbf16>
    %cst_44 = arith.constant dense<0.000000e+00> : vector<8x16xf32>
    %116 = tpu.matmul %113, %114, %cst_44 {dimension_numbers = #tpu.dot_dimension_numbers<[1], [1], [0], [0], [0, 0, 1, 0], [], []>} : vector<8x32xbf16>, vector<16x32xbf16>, vector<8x16xf32> -> vector<8x16xf32>
    %cst_45 = arith.constant 0.176776692 : f32
    %117 = vector.broadcast %cst_45 : f32 to vector<8x16xf32>
    %118 = arith.mulf %116, %117 : vector<8x16xf32>
    %cst_46 = arith.constant -1.000000e+09 : f32
    %119 = vector.broadcast %cst_46 : f32 to vector<8x16xf32>
    %120 = arith.select %72, %118, %119 : vector<8x16xi1>, vector<8x16xf32>
    %cst_47 = arith.constant dense<0xFF800000> : vector<8xf32>
    %121 = vector.multi_reduction <maximumf>, %120, %cst_47 [1] : vector<8x16xf32> to vector<8xf32>
    %122 = vector.shape_cast %121 : vector<8xf32> to vector<8x1xf32>
    %123 = vector.broadcast %122 : vector<8x1xf32> to vector<8x16xf32>
    %124 = arith.subf %120, %123 : vector<8x16xf32>
    %125 = math.exp %124 : vector<8x16xf32>
    %cst_48 = arith.constant dense<0.000000e+00> : vector<8xf32>
    %126 = vector.multi_reduction <add>, %125, %cst_48 [1] : vector<8x16xf32> to vector<8xf32>
    %127 = vector.shape_cast %126 : vector<8xf32> to vector<8x1xf32>
    %128 = tpu.reciprocal %127 {approx = true} : vector<8x1xf32> -> vector<8x1xf32>
    %129 = vector.broadcast %128 : vector<8x1xf32> to vector<8x16xf32>
    %130 = arith.mulf %125, %129 : vector<8x16xf32>
    %131 = arith.truncf %130 : vector<8x16xf32> to vector<8x16xbf16>
    %cst_49 = arith.constant dense<0.000000e+00> : vector<8x32xf32>
    %132 = tpu.matmul %131, %115, %cst_49 {dimension_numbers = #tpu.dot_dimension_numbers<[1], [0], [0], [1], [0, 0, 1, 1], [], []>} : vector<8x16xbf16>, vector<16x32xbf16>, vector<8x32xf32> -> vector<8x32xf32>
    %133 = vector.extract_strided_slice %66 {offsets = [0, 96], sizes = [8, 32], strides = [1, 1]} : vector<8x128xbf16> to vector<8x32xbf16>
    %134 = vector.extract_strided_slice %67 {offsets = [0, 96], sizes = [16, 32], strides = [1, 1]} : vector<16x128xbf16> to vector<16x32xbf16>
    %135 = vector.extract_strided_slice %68 {offsets = [0, 96], sizes = [16, 32], strides = [1, 1]} : vector<16x128xbf16> to vector<16x32xbf16>
    %cst_50 = arith.constant dense<0.000000e+00> : vector<8x16xf32>
    %136 = tpu.matmul %133, %134, %cst_50 {dimension_numbers = #tpu.dot_dimension_numbers<[1], [1], [0], [0], [0, 0, 1, 0], [], []>} : vector<8x32xbf16>, vector<16x32xbf16>, vector<8x16xf32> -> vector<8x16xf32>
    %cst_51 = arith.constant 0.176776692 : f32
    %137 = vector.broadcast %cst_51 : f32 to vector<8x16xf32>
    %138 = arith.mulf %136, %137 : vector<8x16xf32>
    %cst_52 = arith.constant -1.000000e+09 : f32
    %139 = vector.broadcast %cst_52 : f32 to vector<8x16xf32>
    %140 = arith.select %72, %138, %139 : vector<8x16xi1>, vector<8x16xf32>
    %cst_53 = arith.constant dense<0xFF800000> : vector<8xf32>
    %141 = vector.multi_reduction <maximumf>, %140, %cst_53 [1] : vector<8x16xf32> to vector<8xf32>
    %142 = vector.shape_cast %141 : vector<8xf32> to vector<8x1xf32>
    %143 = vector.broadcast %142 : vector<8x1xf32> to vector<8x16xf32>
    %144 = arith.subf %140, %143 : vector<8x16xf32>
    %145 = math.exp %144 : vector<8x16xf32>
    %cst_54 = arith.constant dense<0.000000e+00> : vector<8xf32>
    %146 = vector.multi_reduction <add>, %145, %cst_54 [1] : vector<8x16xf32> to vector<8xf32>
    %147 = vector.shape_cast %146 : vector<8xf32> to vector<8x1xf32>
    %148 = tpu.reciprocal %147 {approx = true} : vector<8x1xf32> -> vector<8x1xf32>
    %149 = vector.broadcast %148 : vector<8x1xf32> to vector<8x16xf32>
    %150 = arith.mulf %145, %149 : vector<8x16xf32>
    %151 = arith.truncf %150 : vector<8x16xf32> to vector<8x16xbf16>
    %cst_55 = arith.constant dense<0.000000e+00> : vector<8x32xf32>
    %152 = tpu.matmul %151, %135, %cst_55 {dimension_numbers = #tpu.dot_dimension_numbers<[1], [0], [0], [1], [0, 0, 1, 1], [], []>} : vector<8x16xbf16>, vector<16x32xbf16>, vector<8x32xf32> -> vector<8x32xf32>
    %153 = tpu.concatenate %92, %112, %132, %152 in 1 : vector<8x32xf32>, vector<8x32xf32>, vector<8x32xf32>, vector<8x32xf32> -> vector<8x128xf32>
    %154 = arith.truncf %153 : vector<8x128xf32> to vector<8x128xbf16>
    %c0_56 = arith.constant 0 : index
    %c0_57 = arith.constant 0 : index
    %155 = vector.load %arg11[%c0_56, %c0_57] : memref<128x128xbf16, #tpu.memory_space<vmem>>, vector<128x128xbf16>
    %cst_58 = arith.constant dense<0.000000e+00> : vector<8x128xf32>
    %156 = tpu.matmul %154, %155, %cst_58 {dimension_numbers = #tpu.dot_dimension_numbers<[1], [0], [0], [1], [0, 0, 1, 1], [], []>} : vector<8x128xbf16>, vector<128x128xbf16>, vector<8x128xf32> -> vector<8x128xf32>
    %c0_59 = arith.constant 0 : index
    %c0_60 = arith.constant 0 : index
    %157 = vector.load %arg12[%c0_59, %c0_60] : memref<1x128xf32, #tpu.memory_space<vmem>>, vector<1x128xf32>
    %158 = vector.broadcast %157 : vector<1x128xf32> to vector<8x128xf32>
    %159 = arith.addf %156, %158 : vector<8x128xf32>
    %160 = arith.addf %1, %159 : vector<8x128xf32>
    %c0_61 = arith.constant 0 : index
    %c0_62 = arith.constant 0 : index
    %161 = vector.load %arg13[%c0_61, %c0_62] : memref<1x128xf32, #tpu.memory_space<vmem>>, vector<1x128xf32>
    %c0_63 = arith.constant 0 : index
    %c0_64 = arith.constant 0 : index
    %162 = vector.load %arg14[%c0_63, %c0_64] : memref<1x128xf32, #tpu.memory_space<vmem>>, vector<1x128xf32>
    %cst_65 = arith.constant dense<0.000000e+00> : vector<8xf32>
    %163 = vector.multi_reduction <add>, %160, %cst_65 [1] : vector<8x128xf32> to vector<8xf32>
    %164 = vector.shape_cast %163 : vector<8xf32> to vector<8x1xf32>
    %cst_66 = arith.constant 1.280000e+02 : f32
    %165 = vector.broadcast %cst_66 : f32 to vector<8x1xf32>
    %166 = arith.divf %164, %165 : vector<8x1xf32>
    %167 = vector.broadcast %166 : vector<8x1xf32> to vector<8x128xf32>
    %168 = arith.subf %160, %167 : vector<8x128xf32>
    %169 = arith.mulf %168, %168 : vector<8x128xf32>
    %cst_67 = arith.constant dense<0.000000e+00> : vector<8xf32>
    %170 = vector.multi_reduction <add>, %169, %cst_67 [1] : vector<8x128xf32> to vector<8xf32>
    %171 = vector.shape_cast %170 : vector<8xf32> to vector<8x1xf32>
    %cst_68 = arith.constant 1.280000e+02 : f32
    %172 = vector.broadcast %cst_68 : f32 to vector<8x1xf32>
    %173 = arith.divf %171, %172 : vector<8x1xf32>
    %174 = vector.broadcast %166 : vector<8x1xf32> to vector<8x128xf32>
    %175 = arith.subf %160, %174 : vector<8x128xf32>
    %cst_69 = arith.constant 9.99999997E-7 : f32
    %176 = vector.broadcast %cst_69 : f32 to vector<8x1xf32>
    %177 = arith.addf %173, %176 : vector<8x1xf32>
    %178 = math.rsqrt %177 : vector<8x1xf32>
    %179 = vector.broadcast %178 : vector<8x1xf32> to vector<8x128xf32>
    %180 = arith.mulf %175, %179 : vector<8x128xf32>
    %181 = vector.broadcast %161 : vector<1x128xf32> to vector<8x128xf32>
    %182 = arith.mulf %180, %181 : vector<8x128xf32>
    %183 = vector.broadcast %162 : vector<1x128xf32> to vector<8x128xf32>
    %184 = arith.addf %182, %183 : vector<8x128xf32>
    %185 = arith.truncf %184 : vector<8x128xf32> to vector<8x128xbf16>
    %cst_70 = arith.constant 0.000000e+00 : f32
    %186 = vector.broadcast %cst_70 : f32 to vector<8x128xf32>
    %c0_71 = arith.constant 0 : index
    %c0_72 = arith.constant 0 : index
    %187 = vector.load %arg15[%c0_71, %c0_72] : memref<128x256xbf16, #tpu.memory_space<vmem>>, vector<128x256xbf16>
    %cst_73 = arith.constant dense<0.000000e+00> : vector<8x256xf32>
    %188 = tpu.matmul %185, %187, %cst_73 {dimension_numbers = #tpu.dot_dimension_numbers<[1], [0], [0], [1], [0, 0, 1, 1], [], []>} : vector<8x128xbf16>, vector<128x256xbf16>, vector<8x256xf32> -> vector<8x256xf32>
    %c0_74 = arith.constant 0 : index
    %c0_75 = arith.constant 0 : index
    %189 = vector.load %arg16[%c0_74, %c0_75] : memref<1x256xf32, #tpu.memory_space<vmem>>, vector<1x256xf32>
    %190 = vector.broadcast %189 : vector<1x256xf32> to vector<8x256xf32>
    %191 = arith.addf %188, %190 : vector<8x256xf32>
    %cst_76 = arith.constant 0.000000e+00 : f32
    %192 = vector.broadcast %cst_76 : f32 to vector<8x256xf32>
    %193 = arith.maximumf %191, %192 : vector<8x256xf32>
    %194 = arith.truncf %193 : vector<8x256xf32> to vector<8x256xbf16>
    %c0_77 = arith.constant 0 : index
    %c0_78 = arith.constant 0 : index
    %195 = vector.load %arg17[%c0_77, %c0_78] : memref<256x128xbf16, #tpu.memory_space<vmem>>, vector<256x128xbf16>
    %cst_79 = arith.constant dense<0.000000e+00> : vector<8x128xf32>
    %196 = tpu.matmul %194, %195, %cst_79 {dimension_numbers = #tpu.dot_dimension_numbers<[1], [0], [0], [1], [0, 0, 1, 1], [], []>} : vector<8x256xbf16>, vector<256x128xbf16>, vector<8x128xf32> -> vector<8x128xf32>
    %197 = arith.addf %186, %196 : vector<8x128xf32>
    %c0_80 = arith.constant 0 : index
    %c0_81 = arith.constant 0 : index
    %198 = vector.load %arg18[%c0_80, %c0_81] : memref<1x128xf32, #tpu.memory_space<vmem>>, vector<1x128xf32>
    %199 = vector.broadcast %198 : vector<1x128xf32> to vector<8x128xf32>
    %200 = arith.addf %197, %199 : vector<8x128xf32>
    %201 = arith.addf %160, %200 : vector<8x128xf32>
    %c0_82 = arith.constant 0 : index
    %c0_83 = arith.constant 0 : index
    %202 = vector.load %arg19[%c0_82, %c0_83] : memref<1x128xf32, #tpu.memory_space<vmem>>, vector<1x128xf32>
    %c0_84 = arith.constant 0 : index
    %c0_85 = arith.constant 0 : index
    %203 = vector.load %arg20[%c0_84, %c0_85] : memref<1x128xf32, #tpu.memory_space<vmem>>, vector<1x128xf32>
    %cst_86 = arith.constant dense<0.000000e+00> : vector<8xf32>
    %204 = vector.multi_reduction <add>, %201, %cst_86 [1] : vector<8x128xf32> to vector<8xf32>
    %205 = vector.shape_cast %204 : vector<8xf32> to vector<8x1xf32>
    %cst_87 = arith.constant 1.280000e+02 : f32
    %206 = vector.broadcast %cst_87 : f32 to vector<8x1xf32>
    %207 = arith.divf %205, %206 : vector<8x1xf32>
    %208 = vector.broadcast %207 : vector<8x1xf32> to vector<8x128xf32>
    %209 = arith.subf %201, %208 : vector<8x128xf32>
    %210 = arith.mulf %209, %209 : vector<8x128xf32>
    %cst_88 = arith.constant dense<0.000000e+00> : vector<8xf32>
    %211 = vector.multi_reduction <add>, %210, %cst_88 [1] : vector<8x128xf32> to vector<8xf32>
    %212 = vector.shape_cast %211 : vector<8xf32> to vector<8x1xf32>
    %cst_89 = arith.constant 1.280000e+02 : f32
    %213 = vector.broadcast %cst_89 : f32 to vector<8x1xf32>
    %214 = arith.divf %212, %213 : vector<8x1xf32>
    %215 = vector.broadcast %207 : vector<8x1xf32> to vector<8x128xf32>
    %216 = arith.subf %201, %215 : vector<8x128xf32>
    %cst_90 = arith.constant 9.99999997E-7 : f32
    %217 = vector.broadcast %cst_90 : f32 to vector<8x1xf32>
    %218 = arith.addf %214, %217 : vector<8x1xf32>
    %219 = math.rsqrt %218 : vector<8x1xf32>
    %220 = vector.broadcast %219 : vector<8x1xf32> to vector<8x128xf32>
    %221 = arith.mulf %216, %220 : vector<8x128xf32>
    %222 = vector.broadcast %202 : vector<1x128xf32> to vector<8x128xf32>
    %223 = arith.mulf %221, %222 : vector<8x128xf32>
    %224 = vector.broadcast %203 : vector<1x128xf32> to vector<8x128xf32>
    %225 = arith.addf %223, %224 : vector<8x128xf32>
    %226 = arith.truncf %225 : vector<8x128xf32> to vector<8x128xbf16>
    %c0_91 = arith.constant 0 : index
    %c0_92 = arith.constant 0 : index
    %227 = vector.load %arg21[%c0_91, %c0_92] : memref<128x64xbf16, #tpu.memory_space<vmem>>, vector<128x64xbf16>
    %cst_93 = arith.constant dense<0.000000e+00> : vector<8x64xf32>
    %228 = tpu.matmul %226, %227, %cst_93 {dimension_numbers = #tpu.dot_dimension_numbers<[1], [0], [0], [1], [0, 0, 1, 1], [], []>} : vector<8x128xbf16>, vector<128x64xbf16>, vector<8x64xf32> -> vector<8x64xf32>
    %c0_94 = arith.constant 0 : index
    %c0_95 = arith.constant 0 : index
    %229 = vector.load %arg22[%c0_94, %c0_95] : memref<1x64xf32, #tpu.memory_space<vmem>>, vector<1x64xf32>
    %230 = vector.broadcast %229 : vector<1x64xf32> to vector<8x64xf32>
    %231 = arith.addf %228, %230 : vector<8x64xf32>
    %cst_96 = arith.constant 0.000000e+00 : f32
    %232 = vector.broadcast %cst_96 : f32 to vector<8x64xf32>
    %233 = arith.maximumf %231, %232 : vector<8x64xf32>
    %234 = arith.truncf %233 : vector<8x64xf32> to vector<8x64xbf16>
    %c0_97 = arith.constant 0 : index
    %c0_98 = arith.constant 0 : index
    %235 = vector.load %arg23[%c0_97, %c0_98] : memref<64x128xbf16, #tpu.memory_space<vmem>>, vector<64x128xbf16>
    %cst_99 = arith.constant dense<0.000000e+00> : vector<8x128xf32>
    %236 = tpu.matmul %234, %235, %cst_99 {dimension_numbers = #tpu.dot_dimension_numbers<[1], [0], [0], [1], [0, 0, 1, 1], [], []>} : vector<8x64xbf16>, vector<64x128xbf16>, vector<8x128xf32> -> vector<8x128xf32>
    %c0_100 = arith.constant 0 : index
    %c0_101 = arith.constant 0 : index
    %237 = vector.load %arg24[%c0_100, %c0_101] : memref<1x128xf32, #tpu.memory_space<vmem>>, vector<1x128xf32>
    %238 = vector.broadcast %237 : vector<1x128xf32> to vector<8x128xf32>
    %239 = arith.addf %236, %238 : vector<8x128xf32>
    %240 = arith.addf %201, %239 : vector<8x128xf32>
    %c0_102 = arith.constant 0 : index
    %c0_103 = arith.constant 0 : index
    %c0_104 = arith.constant 0 : index
    %241 = vector.load %arg25[%c0_102, %c0_103, %c0_104] : memref<1x8x128xf32, #tpu.memory_space<vmem>>, vector<1x8x128xf32>
    %242 = vector.shape_cast %241 : vector<1x8x128xf32> to vector<8x128xf32>
    %243 = vector.shape_cast %240 : vector<8x128xf32> to vector<1x8x128xf32>
    tpu.vector_store %arg25[%c0_102, %c0_103, %c0_104], %243 {strides = array<i32>} : memref<1x8x128xf32, #tpu.memory_space<vmem>>, vector<1x8x128xf32>,
    return
  }
  func.func @transform_0(%arg0: i32, %arg1: i32) -> (i32, i32, i32) {
    %c0_i32 = arith.constant 0 : i32
    %c0_i32_0 = arith.constant 0 : i32
    return %arg0, %arg1, %c0_i32 : i32, i32, i32
  }
  func.func @transform_1(%arg0: i32, %arg1: i32) -> (i32, i32, i32) {
    %c0_i32 = arith.constant 0 : i32
    %c0_i32_0 = arith.constant 0 : i32
    %c0_i32_1 = arith.constant 0 : i32
    return %arg0, %c0_i32, %c0_i32_0 : i32, i32, i32
  }
  func.func @transform_2(%arg0: i32, %arg1: i32) -> (i32, i32, i32) {
    %c0_i32 = arith.constant 0 : i32
    %c0_i32_0 = arith.constant 0 : i32
    %c0_i32_1 = arith.constant 0 : i32
    return %arg0, %c0_i32, %c0_i32_0 : i32, i32, i32
  }
  func.func @transform_3(%arg0: i32, %arg1: i32) -> (i32, i32) {
    %c0_i32 = arith.constant 0 : i32
    %c0_i32_0 = arith.constant 0 : i32
    %c0_i32_1 = arith.constant 0 : i32
    return %c0_i32, %c0_i32_0 : i32, i32
  }
  func.func @transform_4(%arg0: i32, %arg1: i32) -> (i32, i32) {
    %c0_i32 = arith.constant 0 : i32
    %c0_i32_0 = arith.constant 0 : i32
    %c0_i32_1 = arith.constant 0 : i32
    return %c0_i32, %c0_i32_0 : i32, i32
  }
  func.func @transform_5(%arg0: i32, %arg1: i32) -> (i32, i32) {
    %c0_i32 = arith.constant 0 : i32
    %c0_i32_0 = arith.constant 0 : i32
    %c0_i32_1 = arith.constant 0 : i32
    return %c0_i32, %c0_i32_0 : i32, i32
  }
  func.func @transform_6(%arg0: i32, %arg1: i32) -> (i32, i32) {
    %c0_i32 = arith.constant 0 : i32
    %c0_i32_0 = arith.constant 0 : i32
    %c0_i32_1 = arith.constant 0 : i32
    return %c0_i32, %c0_i32_0 : i32, i32
  }
  func.func @transform_7(%arg0: i32, %arg1: i32) -> (i32, i32) {
    %c0_i32 = arith.constant 0 : i32
    %c0_i32_0 = arith.constant 0 : i32
    %c0_i32_1 = arith.constant 0 : i32
    return %c0_i32, %c0_i32_0 : i32, i32
  }
  func.func @transform_8(%arg0: i32, %arg1: i32) -> (i32, i32) {
    %c0_i32 = arith.constant 0 : i32
    %c0_i32_0 = arith.constant 0 : i32
    %c0_i32_1 = arith.constant 0 : i32
    return %c0_i32, %c0_i32_0 : i32, i32
  }
  func.func @transform_9(%arg0: i32, %arg1: i32) -> (i32, i32) {
    %c0_i32 = arith.constant 0 : i32
    %c0_i32_0 = arith.constant 0 : i32
    %c0_i32_1 = arith.constant 0 : i32
    return %c0_i32, %c0_i32_0 : i32, i32
  }
  func.func @transform_10(%arg0: i32, %arg1: i32) -> (i32, i32) {
    %c0_i32 = arith.constant 0 : i32
    %c0_i32_0 = arith.constant 0 : i32
    %c0_i32_1 = arith.constant 0 : i32
    return %c0_i32, %c0_i32_0 : i32, i32
  }
  func.func @transform_11(%arg0: i32, %arg1: i32) -> (i32, i32) {
    %c0_i32 = arith.constant 0 : i32
    %c0_i32_0 = arith.constant 0 : i32
    %c0_i32_1 = arith.constant 0 : i32
    return %c0_i32, %c0_i32_0 : i32, i32
  }
  func.func @transform_12(%arg0: i32, %arg1: i32) -> (i32, i32) {
    %c0_i32 = arith.constant 0 : i32
    %c0_i32_0 = arith.constant 0 : i32
    %c0_i32_1 = arith.constant 0 : i32
    return %c0_i32, %c0_i32_0 : i32, i32
  }
  func.func @transform_13(%arg0: i32, %arg1: i32) -> (i32, i32) {
    %c0_i32 = arith.constant 0 : i32
    %c0_i32_0 = arith.constant 0 : i32
    %c0_i32_1 = arith.constant 0 : i32
    return %c0_i32, %c0_i32_0 : i32, i32
  }
  func.func @transform_14(%arg0: i32, %arg1: i32) -> (i32, i32) {
    %c0_i32 = arith.constant 0 : i32
    %c0_i32_0 = arith.constant 0 : i32
    %c0_i32_1 = arith.constant 0 : i32
    return %c0_i32, %c0_i32_0 : i32, i32
  }
  func.func @transform_15(%arg0: i32, %arg1: i32) -> (i32, i32) {
    %c0_i32 = arith.constant 0 : i32
    %c0_i32_0 = arith.constant 0 : i32
    %c0_i32_1 = arith.constant 0 : i32
    return %c0_i32, %c0_i32_0 : i32, i32
  }
  func.func @transform_16(%arg0: i32, %arg1: i32) -> (i32, i32) {
    %c0_i32 = arith.constant 0 : i32
    %c0_i32_0 = arith.constant 0 : i32
    %c0_i32_1 = arith.constant 0 : i32
    return %c0_i32, %c0_i32_0 : i32, i32
  }
  func.func @transform_17(%arg0: i32, %arg1: i32) -> (i32, i32) {
    %c0_i32 = arith.constant 0 : i32
    %c0_i32_0 = arith.constant 0 : i32
    %c0_i32_1 = arith.constant 0 : i32
    return %c0_i32, %c0_i32_0 : i32, i32
  }
  func.func @transform_18(%arg0: i32, %arg1: i32) -> (i32, i32) {
    %c0_i32 = arith.constant 0 : i32
    %c0_i32_0 = arith.constant 0 : i32
    %c0_i32_1 = arith.constant 0 : i32
    return %c0_i32, %c0_i32_0 : i32, i32
  }
  func.func @transform_19(%arg0: i32, %arg1: i32) -> (i32, i32) {
    %c0_i32 = arith.constant 0 : i32
    %c0_i32_0 = arith.constant 0 : i32
    %c0_i32_1 = arith.constant 0 : i32
    return %c0_i32, %c0_i32_0 : i32, i32
  }
  func.func @transform_20(%arg0: i32, %arg1: i32) -> (i32, i32) {
    %c0_i32 = arith.constant 0 : i32
    %c0_i32_0 = arith.constant 0 : i32
    %c0_i32_1 = arith.constant 0 : i32
    return %c0_i32, %c0_i32_0 : i32, i32
  }
  func.func @transform_21(%arg0: i32, %arg1: i32) -> (i32, i32) {
    %c0_i32 = arith.constant 0 : i32
    %c0_i32_0 = arith.constant 0 : i32
    %c0_i32_1 = arith.constant 0 : i32
    return %c0_i32, %c0_i32_0 : i32, i32
  }
  func.func @transform_22(%arg0: i32, %arg1: i32) -> (i32, i32) {
    %c0_i32 = arith.constant 0 : i32
    %c0_i32_0 = arith.constant 0 : i32
    %c0_i32_1 = arith.constant 0 : i32
    return %c0_i32, %c0_i32_0 : i32, i32
  }
  func.func @transform_23(%arg0: i32, %arg1: i32) -> (i32, i32, i32) {
    %c0_i32 = arith.constant 0 : i32
    %c0_i32_0 = arith.constant 0 : i32
    return %arg0, %arg1, %c0_i32 : i32, i32, i32
  }
}

</mosaic_0001>

<llo_original>
// kernel: tpu_custom_call.1
$region0: #{tpu_custom_call.1}
  #allocation0 [shape = 'u32[]', space=smem, size = 0x4, offset = 0x4, fixed_abs, tag = 'smem constant byte address 0x4 - core index']
  #allocation1 [shape = 'u32[72,128]{1,0:T(1,128)}', space=vmem, size = 0x9000, scoped, tag = 'internal scratch']
  %s0 = inlined_call_operand.vmem [shape: f32[2,16,128], index: 0, kind: input, shape index: {}]
  %s1 = inlined_call_operand.hbm [shape: f32[2,16,128], index: 1, kind: input, shape index: {}]
  %s2 = inlined_call_operand.vmem [shape: f32[2,1,16], index: 2, kind: input, shape index: {}]
  %s3 = inlined_call_operand.hbm [shape: f32[1,128], index: 3, kind: input, shape index: {}]
  %s4 = inlined_call_operand.hbm [shape: f32[1,128], index: 4, kind: input, shape index: {}]
  %s5 = inlined_call_operand.vmem [shape: bf16[128,128], index: 5, kind: input, shape index: {}]
  %s6 = inlined_call_operand.vmem [shape: f32[1,128], index: 6, kind: input, shape index: {}]
  %s7 = inlined_call_operand.hbm [shape: bf16[128,256], index: 7, kind: input, shape index: {}]
  %s8 = inlined_call_operand.vmem [shape: f32[1,256], index: 8, kind: input, shape index: {}]
  %s9 = inlined_call_operand.hbm [shape: bf16[128,128], index: 9, kind: input, shape index: {}]
  %s10 = inlined_call_operand.vmem [shape: f32[1,128], index: 10, kind: input, shape index: {}]
  %s11 = inlined_call_operand.vmem [shape: f32[1,128], index: 11, kind: input, shape index: {}]
  %s12 = inlined_call_operand.vmem [shape: f32[1,128], index: 12, kind: input, shape index: {}]
  %s13 = inlined_call_operand.hbm [shape: bf16[128,256], index: 13, kind: input, shape index: {}]
  %s14 = inlined_call_operand.vmem [shape: f32[1,256], index: 14, kind: input, shape index: {}]
  %s15 = inlined_call_operand.hbm [shape: bf16[256,128], index: 15, kind: input, shape index: {}]
  %s16 = inlined_call_operand.vmem [shape: f32[1,128], index: 16, kind: input, shape index: {}]
  %s17 = inlined_call_operand.vmem [shape: f32[1,128], index: 17, kind: input, shape index: {}]
  %s18 = inlined_call_operand.vmem [shape: f32[1,128], index: 18, kind: input, shape index: {}]
  %s19 = inlined_call_operand.vmem [shape: bf16[128,64], index: 19, kind: input, shape index: {}]
  %s20 = inlined_call_operand.vmem [shape: f32[1,64], index: 20, kind: input, shape index: {}]
  %s21 = inlined_call_operand.hbm [shape: bf16[64,128], index: 21, kind: input, shape index: {}]
  %s22 = inlined_call_operand.vmem [shape: f32[1,128], index: 22, kind: input, shape index: {}]
  %s23 = inlined_call_operand.hbm [shape: f32[2,16,128], index: 23, kind: output, shape index: {}]
  %s24 = sld [smem:[#allocation0]]
  $region157: #{tpu_custom_call.1} parent=0
    _
  %s26 = ssub.s32 1, %s24
  %s27 = scalar_select 0, %s26, %s24
  $region1: #{tpu_custom_call.1} parent=0
    #allocation2 [shape = 'u8[16384]{0}', space=vmem, size = 0x4000, scoped, tag = 'input window, operand 1']
    #allocation3 [shape = 's32[2]{0}', space=sflag, size = 0x8, scoped, tag = 'scoped memory for tpu_custom_call.1']
    #allocation4 [shape = 's32[2]{0}', space=sflag, size = 0x8, scoped, tag = 'scoped memory for tpu_custom_call.1']
    #allocation5 [shape = 'u8[512]{0}', space=vmem, size = 0x400, scoped, tag = 'input window, operand 3, single buffered']
    #allocation6 [shape = 's32[1]{0}', space=sflag, size = 0x4, scoped, tag = 'scoped memory for tpu_custom_call.1']
    #allocation7 [shape = 'u8[512]{0}', space=vmem, size = 0x400, scoped, tag = 'input window, operand 4, single buffered']
    #allocation8 [shape = 'u8[65536]{0}', space=vmem, size = 0x10000, scoped, tag = 'input window, operand 7, single buffered']
    #allocation9 [shape = 's32[1]{0}', space=sflag, size = 0x4, scoped, tag = 'scoped memory for tpu_custom_call.1']
    #allocation10 [shape = 'u8[32768]{0}', space=vmem, size = 0x8000, scoped, tag = 'input window, operand 9, single buffered']
    #allocation11 [shape = 'u8[65536]{0}', space=vmem, size = 0x10000, scoped, tag = 'input window, operand 13, single buffered']
    #allocation12 [shape = 's32[1]{0}', space=sflag, size = 0x4, scoped, tag = 'scoped memory for tpu_custom_call.1']
    #allocation13 [shape = 'u8[65536]{0}', space=vmem, size = 0x10000, scoped, tag = 'input window, operand 15, single buffered']
    #allocation14 [shape = 'u8[16384]{0}', space=vmem, size = 0x4000, scoped, tag = 'input window, operand 21, single buffered']
    #allocation15 [shape = 's32[1]{0}', space=sflag, size = 0x4, scoped, tag = 'scoped memory for tpu_custom_call.1']
    #allocation16 [shape = 'u8[8192]{0}', space=vmem, size = 0x2000, scoped, tag = 'output window, operand 0']
    %28 = vsyncpa [#allocation3], 0
    %s29 = scalar_lea.sflag [#allocation3], 1
    %30 = vsyncpa %s29, 0
    %31 = vsyncpa [#allocation6], 0
    %32 = vsyncpa [#allocation9], 0
    %33 = vsyncpa [#allocation12], 0
    %34 = vsyncpa [#allocation15], 0
    %35 = vsyncpa [#allocation4], 0
    %s36 = scalar_lea.sflag [#allocation4], 1
    %37 = vsyncpa %s36, 0
    loop: start=0, step=1, limit=6
    $region2: #{tpu_custom_call.1} parent=1 // loop_pre_header
      _
    $region3: #{tpu_custom_call.1} parent=1 // loop_header
      %s39 = sphi 0, %s43
      %p40 = scmp.ge.s32.totalorder %s39, 6
      %s46 = sphi 0, %s58
      %s47 = sphi 0, %s54
      %s48 = sphi 0, %s46
      %s49 = sphi 0, %s47
      %s50 = sphi 0, %s48
      %s51 = sphi 0, %s49
      %s63 = sphi 0, %s65
      %s66 = sphi 0, %s63
      %s67 = sphi 0, %s66
      %s83 = sphi 0, %s67
      %s89 = sphi 0, %s91
      %s92 = sphi 0, %s89
      %s93 = sphi 0, %s92
      %s109 = sphi 0, %s93
      %s115 = sphi 0, %s117
      %s118 = sphi 0, %s115
      %s119 = sphi 0, %s118
      %s135 = sphi 0, %s119
      %s139 = sphi 0, %s139
      %s141 = sphi 0, %s139
      %s142 = sphi 0, %s141
      %s156 = sphi 0, %s142
      %s160 = sphi 0, %s160
      %s162 = sphi 0, %s160
      %s163 = sphi 0, %s162
      %s177 = sphi 0, %s163
      %s181 = sphi 0, %s181
      %s183 = sphi 0, %s181
      %s184 = sphi 0, %s183
      %s198 = sphi 0, %s184
      %s202 = sphi 0, %s202
      %s204 = sphi 0, %s202
      %s205 = sphi 0, %s204
      %s219 = sphi 0, %s205
      %s223 = sphi 0, %s223
      %s225 = sphi 0, %s223
      %s226 = sphi 0, %s225
      %s240 = sphi 0, %s226
      %s244 = sphi 0, %s244
      %s246 = sphi 0, %s244
      %s247 = sphi 0, %s246
      %s261 = sphi 0, %s247
      %s265 = sphi 0, %s265
      %s267 = sphi 0, %s265
      %s268 = sphi 0, %s267
      %s282 = sphi 0, %s268
      %s286 = sphi 0, %s286
      %s288 = sphi 0, %s286
      %s289 = sphi 0, %s288
      %s303 = sphi 0, %s289
      %s307 = sphi 0, %s307
      %s309 = sphi 0, %s307
      %s310 = sphi 0, %s309
      %s324 = sphi 0, %s310
      %s328 = sphi 0, %s328
      %s330 = sphi 0, %s328
      %s331 = sphi 0, %s330
      %s345 = sphi 0, %s331
      %s349 = sphi 0, %s349
      %s351 = sphi 0, %s349
      %s352 = sphi 0, %s351
      %s366 = sphi 0, %s352
      %s370 = sphi 0, %s370
      %s372 = sphi 0, %s370
      %s373 = sphi 0, %s372
      %s387 = sphi 0, %s373
      %s391 = sphi 0, %s391
      %s393 = sphi 0, %s391
      %s394 = sphi 0, %s393
      %s408 = sphi 0, %s394
      %s412 = sphi 0, %s412
      %s414 = sphi 0, %s412
      %s415 = sphi 0, %s414
      %s429 = sphi 0, %s415
      %s433 = sphi 0, %s433
      %s435 = sphi 0, %s433
      %s436 = sphi 0, %s435
      %s450 = sphi 0, %s436
      %s454 = sphi 0, %s454
      %s456 = sphi 0, %s454
      %s457 = sphi 0, %s456
      %s471 = sphi 0, %s457
      %s475 = sphi 0, %s475
      %s477 = sphi 0, %s475
      %s478 = sphi 0, %s477
      %s492 = sphi 0, %s478
      %s496 = sphi 0, %s496
      %s498 = sphi 0, %s496
      %s499 = sphi 0, %s498
      %s513 = sphi 0, %s499
      %s517 = sphi 0, %s517
      %s519 = sphi 0, %s517
      %s520 = sphi 0, %s519
      %s534 = sphi 0, %s520
      %s538 = sphi 0, %s538
      %s540 = sphi 0, %s538
      %s541 = sphi 0, %s540
      %s555 = sphi 0, %s541
      %s563 = sphi 0, %s565
      %s566 = sphi 0, %s563
      %s567 = sphi 0, %s566
      %s583 = sphi 0, %s567
    $region4: #{tpu_custom_call.1} parent=1 // loop_header_branch
      %42 = sbr.rel (%p40) target = $region8
    $region5: #{tpu_custom_call.1} parent=1 // loop_body
      %s44 = ssub.s32 %s39, 1
      %s45 = ssub.s32 %s39, 2
      %s52 = sadd.s32 1, %s47
      %p53 = scmp.ge.s32.totalorder %s52, 2
      %s54 = scalar_select %p53, 0, %s52
      %s55 = sadd.s32 1, %s46
      %s56 = scalar_select %p53, %s55, %s46
      %p57 = scmp.ge.s32.totalorder %s56, 2
      %s58 = scalar_select %p57, 0, %s56
      %s59 = ssub.s32 %s46, %s58
      %s60 = ssub.s32 %s47, %s54
      %s61 = sor.u32 %s59, %s60
      %p62 = scmp.eq.s32.totalorder %s61, 0
      %s64 = sadd.s32 %s63, 1
      %s65 = scalar_select %p62, %s63, %s64
      %p68 = pneg %p62
      %p69 = scmp.eq.s32.totalorder %s39, 3
      %p70 = por %p68, %p69
      %p71 = scmp.ne.s32.totalorder %s63, %s66
      %p72 = scmp.eq.s32.totalorder %s39, 0
      %p73 = por %p71, %p72
      %p74 = scmp.ne.s32.totalorder %s63, %s66
      %p75 = scmp.eq.s32.totalorder %s44, 3
      %p76 = por %p74, %p75
      %p77 = scmp.ne.s32.totalorder %s66, %s67
      %p78 = scmp.eq.s32.totalorder %s44, 0
      %p79 = por %p77, %p78
      %p80 = scmp.ne.s32.totalorder %s66, %s67
      %p81 = scmp.eq.s32.totalorder %s45, 3
      %p82 = por %p80, %p81
      %p84 = scmp.ne.s32.totalorder %s67, %s83
      %p85 = scmp.eq.s32.totalorder %s45, 0
      %p86 = por %p84, %p85
      %s87 = ssub.s32 %s46, %s58
      %p88 = scmp.eq.s32.totalorder %s87, 0
      %s90 = sadd.s32 %s89, 1
      %s91 = scalar_select %p88, %s89, %s90
      %p94 = pneg %p88
      %p95 = scmp.eq.s32.totalorder %s39, 3
      %p96 = por %p94, %p95
      %p97 = scmp.ne.s32.totalorder %s89, %s92
      %p98 = scmp.eq.s32.totalorder %s39, 0
      %p99 = por %p97, %p98
      %p100 = scmp.ne.s32.totalorder %s89, %s92
      %p101 = scmp.eq.s32.totalorder %s44, 3
      %p102 = por %p100, %p101
      %p103 = scmp.ne.s32.totalorder %s92, %s93
      %p104 = scmp.eq.s32.totalorder %s44, 0
      %p105 = por %p103, %p104
      %p106 = scmp.ne.s32.totalorder %s92, %s93
      %p107 = scmp.eq.s32.totalorder %s45, 3
      %p108 = por %p106, %p107
      %p110 = scmp.ne.s32.totalorder %s93, %s109
      %p111 = scmp.eq.s32.totalorder %s45, 0
      %p112 = por %p110, %p111
      %s113 = ssub.s32 %s46, %s58
      %p114 = scmp.eq.s32.totalorder %s113, 0
      %s116 = sadd.s32 %s115, 1
      %s117 = scalar_select %p114, %s115, %s116
      %p120 = pneg %p114
      %p121 = scmp.eq.s32.totalorder %s39, 3
      %p122 = por %p120, %p121
      %p123 = scmp.ne.s32.totalorder %s115, %s118
      %p124 = scmp.eq.s32.totalorder %s39, 0
      %p125 = por %p123, %p124
      %p126 = scmp.ne.s32.totalorder %s115, %s118
      %p127 = scmp.eq.s32.totalorder %s44, 3
      %p128 = por %p126, %p127
      %p129 = scmp.ne.s32.totalorder %s118, %s119
      %p130 = scmp.eq.s32.totalorder %s44, 0
      %p131 = por %p129, %p130
      %p132 = scmp.ne.s32.totalorder %s118, %s119
      %p133 = scmp.eq.s32.totalorder %s45, 3
      %p134 = por %p132, %p133
      %p136 = scmp.ne.s32.totalorder %s119, %s135
      %p137 = scmp.eq.s32.totalorder %s45, 0
      %p138 = por %p136, %p137
      %s140 = sadd.s32 %s139, 1
      %p143 = scmp.eq.s32.totalorder %s39, 3
      %p144 = scmp.ne.s32.totalorder %s139, %s141
      %p145 = scmp.eq.s32.totalorder %s39, 0
      %p146 = por %p144, %p145
      %p147 = scmp.ne.s32.totalorder %s139, %s141
      %p148 = scmp.eq.s32.totalorder %s44, 3
      %p149 = por %p147, %p148
      %p150 = scmp.ne.s32.totalorder %s141, %s142
      %p151 = scmp.eq.s32.totalorder %s44, 0
      %p152 = por %p150, %p151
      %p153 = scmp.ne.s32.totalorder %s141, %s142
      %p154 = scmp.eq.s32.totalorder %s45, 3
      %p155 = por %p153, %p154
      %p157 = scmp.ne.s32.totalorder %s142, %s156
      %p158 = scmp.eq.s32.totalorder %s45, 0
      %p159 = por %p157, %p158
      %s161 = sadd.s32 %s160, 1
      %p164 = scmp.eq.s32.totalorder %s39, 3
      %p165 = scmp.ne.s32.totalorder %s160, %s162
      %p166 = scmp.eq.s32.totalorder %s39, 0
      %p167 = por %p165, %p166
      %p168 = scmp.ne.s32.totalorder %s160, %s162
      %p169 = scmp.eq.s32.totalorder %s44, 3
      %p170 = por %p168, %p169
      %p171 = scmp.ne.s32.totalorder %s162, %s163
      %p172 = scmp.eq.s32.totalorder %s44, 0
      %p173 = por %p171, %p172
      %p174 = scmp.ne.s32.totalorder %s162, %s163
      %p175 = scmp.eq.s32.totalorder %s45, 3
      %p176 = por %p174, %p175
      %p178 = scmp.ne.s32.totalorder %s163, %s177
      %p179 = scmp.eq.s32.totalorder %s45, 0
      %p180 = por %p178, %p179
      %s182 = sadd.s32 %s181, 1
      %p185 = scmp.eq.s32.totalorder %s39, 3
      %p186 = scmp.ne.s32.totalorder %s181, %s183
      %p187 = scmp.eq.s32.totalorder %s39, 0
      %p188 = por %p186, %p187
      %p189 = scmp.ne.s32.totalorder %s181, %s183
      %p190 = scmp.eq.s32.totalorder %s44, 3
      %p191 = por %p189, %p190
      %p192 = scmp.ne.s32.totalorder %s183, %s184
      %p193 = scmp.eq.s32.totalorder %s44, 0
      %p194 = por %p192, %p193
      %p195 = scmp.ne.s32.totalorder %s183, %s184
      %p196 = scmp.eq.s32.totalorder %s45, 3
      %p197 = por %p195, %p196
      %p199 = scmp.ne.s32.totalorder %s184, %s198
      %p200 = scmp.eq.s32.totalorder %s45, 0
      %p201 = por %p199, %p200
      %s203 = sadd.s32 %s202, 1
      %p206 = scmp.eq.s32.totalorder %s39, 3
      %p207 = scmp.ne.s32.totalorder %s202, %s204
      %p208 = scmp.eq.s32.totalorder %s39, 0
      %p209 = por %p207, %p208
      %p210 = scmp.ne.s32.totalorder %s202, %s204
      %p211 = scmp.eq.s32.totalorder %s44, 3
      %p212 = por %p210, %p211
      %p213 = scmp.ne.s32.totalorder %s204, %s205
      %p214 = scmp.eq.s32.totalorder %s44, 0
      %p215 = por %p213, %p214
      %p216 = scmp.ne.s32.totalorder %s204, %s205
      %p217 = scmp.eq.s32.totalorder %s45, 3
      %p218 = por %p216, %p217
      %p220 = scmp.ne.s32.totalorder %s205, %s219
      %p221 = scmp.eq.s32.totalorder %s45, 0
      %p222 = por %p220, %p221
      %s224 = sadd.s32 %s223, 1
      %p227 = scmp.eq.s32.totalorder %s39, 3
      %p228 = scmp.ne.s32.totalorder %s223, %s225
      %p229 = scmp.eq.s32.totalorder %s39, 0
      %p230 = por %p228, %p229
      %p231 = scmp.ne.s32.totalorder %s223, %s225
      %p232 = scmp.eq.s32.totalorder %s44, 3
      %p233 = por %p231, %p232
      %p234 = scmp.ne.s32.totalorder %s225, %s226
      %p235 = scmp.eq.s32.totalorder %s44, 0
      %p236 = por %p234, %p235
      %p237 = scmp.ne.s32.totalorder %s225, %s226
      %p238 = scmp.eq.s32.totalorder %s45, 3
      %p239 = por %p237, %p238
      %p241 = scmp.ne.s32.totalorder %s226, %s240
      %p242 = scmp.eq.s32.totalorder %s45, 0
      %p243 = por %p241, %p242
      %s245 = sadd.s32 %s244, 1
      %p248 = scmp.eq.s32.totalorder %s39, 3
      %p249 = scmp.ne.s32.totalorder %s244, %s246
      %p250 = scmp.eq.s32.totalorder %s39, 0
      %p251 = por %p249, %p250
      %p252 = scmp.ne.s32.totalorder %s244, %s246
      %p253 = scmp.eq.s32.totalorder %s44, 3
      %p254 = por %p252, %p253
      %p255 = scmp.ne.s32.totalorder %s246, %s247
      %p256 = scmp.eq.s32.totalorder %s44, 0
      %p257 = por %p255, %p256
      %p258 = scmp.ne.s32.totalorder %s246, %s247
      %p259 = scmp.eq.s32.totalorder %s45, 3
      %p260 = por %p258, %p259
      %p262 = scmp.ne.s32.totalorder %s247, %s261
      %p263 = scmp.eq.s32.totalorder %s45, 0
      %p264 = por %p262, %p263
      %s266 = sadd.s32 %s265, 1
      %p269 = scmp.eq.s32.totalorder %s39, 3
      %p270 = scmp.ne.s32.totalorder %s265, %s267
      %p271 = scmp.eq.s32.totalorder %s39, 0
      %p272 = por %p270, %p271
      %p273 = scmp.ne.s32.totalorder %s265, %s267
      %p274 = scmp.eq.s32.totalorder %s44, 3
      %p275 = por %p273, %p274
      %p276 = scmp.ne.s32.totalorder %s267, %s268
      %p277 = scmp.eq.s32.totalorder %s44, 0
      %p278 = por %p276, %p277
      %p279 = scmp.ne.s32.totalorder %s267, %s268
      %p280 = scmp.eq.s32.totalorder %s45, 3
      %p281 = por %p279, %p280
      %p283 = scmp.ne.s32.totalorder %s268, %s282
      %p284 = scmp.eq.s32.totalorder %s45, 0
      %p285 = por %p283, %p284
      %s287 = sadd.s32 %s286, 1
      %p290 = scmp.eq.s32.totalorder %s39, 3
      %p291 = scmp.ne.s32.totalorder %s286, %s288
      %p292 = scmp.eq.s32.totalorder %s39, 0
      %p293 = por %p291, %p292
      %p294 = scmp.ne.s32.totalorder %s286, %s288
      %p295 = scmp.eq.s32.totalorder %s44, 3
      %p296 = por %p294, %p295
      %p297 = scmp.ne.s32.totalorder %s288, %s289
      %p298 = scmp.eq.s32.totalorder %s44, 0
      %p299 = por %p297, %p298
      %p300 = scmp.ne.s32.totalorder %s288, %s289
      %p301 = scmp.eq.s32.totalorder %s45, 3
      %p302 = por %p300, %p301
      %p304 = scmp.ne.s32.totalorder %s289, %s303
      %p305 = scmp.eq.s32.totalorder %s45, 0
      %p306 = por %p304, %p305
      %s308 = sadd.s32 %s307, 1
      %p311 = scmp.eq.s32.totalorder %s39, 3
      %p312 = scmp.ne.s32.totalorder %s307, %s309
      %p313 = scmp.eq.s32.totalorder %s39, 0
      %p314 = por %p312, %p313
      %p315 = scmp.ne.s32.totalorder %s307, %s309
      %p316 = scmp.eq.s32.totalorder %s44, 3
      %p317 = por %p315, %p316
      %p318 = scmp.ne.s32.totalorder %s309, %s310
      %p319 = scmp.eq.s32.totalorder %s44, 0
      %p320 = por %p318, %p319
      %p321 = scmp.ne.s32.totalorder %s309, %s310
      %p322 = scmp.eq.s32.totalorder %s45, 3
      %p323 = por %p321, %p322
      %p325 = scmp.ne.s32.totalorder %s310, %s324
      %p326 = scmp.eq.s32.totalorder %s45, 0
      %p327 = por %p325, %p326
      %s329 = sadd.s32 %s328, 1
      %p332 = scmp.eq.s32.totalorder %s39, 3
      %p333 = scmp.ne.s32.totalorder %s328, %s330
      %p334 = scmp.eq.s32.totalorder %s39, 0
      %p335 = por %p333, %p334
      %p336 = scmp.ne.s32.totalorder %s328, %s330
      %p337 = scmp.eq.s32.totalorder %s44, 3
      %p338 = por %p336, %p337
      %p339 = scmp.ne.s32.totalorder %s330, %s331
      %p340 = scmp.eq.s32.totalorder %s44, 0
      %p341 = por %p339, %p340
      %p342 = scmp.ne.s32.totalorder %s330, %s331
      %p343 = scmp.eq.s32.totalorder %s45, 3
      %p344 = por %p342, %p343
      %p346 = scmp.ne.s32.totalorder %s331, %s345
      %p347 = scmp.eq.s32.totalorder %s45, 0
      %p348 = por %p346, %p347
      %s350 = sadd.s32 %s349, 1
      %p353 = scmp.eq.s32.totalorder %s39, 3
      %p354 = scmp.ne.s32.totalorder %s349, %s351
      %p355 = scmp.eq.s32.totalorder %s39, 0
      %p356 = por %p354, %p355
      %p357 = scmp.ne.s32.totalorder %s349, %s351
      %p358 = scmp.eq.s32.totalorder %s44, 3
      %p359 = por %p357, %p358
      %p360 = scmp.ne.s32.totalorder %s351, %s352
      %p361 = scmp.eq.s32.totalorder %s44, 0
      %p362 = por %p360, %p361
      %p363 = scmp.ne.s32.totalorder %s351, %s352
      %p364 = scmp.eq.s32.totalorder %s45, 3
      %p365 = por %p363, %p364
      %p367 = scmp.ne.s32.totalorder %s352, %s366
      %p368 = scmp.eq.s32.totalorder %s45, 0
      %p369 = por %p367, %p368
      %s371 = sadd.s32 %s370, 1
      %p374 = scmp.eq.s32.totalorder %s39, 3
      %p375 = scmp.ne.s32.totalorder %s370, %s372
      %p376 = scmp.eq.s32.totalorder %s39, 0
      %p377 = por %p375, %p376
      %p378 = scmp.ne.s32.totalorder %s370, %s372
      %p379 = scmp.eq.s32.totalorder %s44, 3
      %p380 = por %p378, %p379
      %p381 = scmp.ne.s32.totalorder %s372, %s373
      %p382 = scmp.eq.s32.totalorder %s44, 0
      %p383 = por %p381, %p382
      %p384 = scmp.ne.s32.totalorder %s372, %s373
      %p385 = scmp.eq.s32.totalorder %s45, 3
      %p386 = por %p384, %p385
      %p388 = scmp.ne.s32.totalorder %s373, %s387
      %p389 = scmp.eq.s32.totalorder %s45, 0
      %p390 = por %p388, %p389
      %s392 = sadd.s32 %s391, 1
      %p395 = scmp.eq.s32.totalorder %s39, 3
      %p396 = scmp.ne.s32.totalorder %s391, %s393
      %p397 = scmp.eq.s32.totalorder %s39, 0
      %p398 = por %p396, %p397
      %p399 = scmp.ne.s32.totalorder %s391, %s393
      %p400 = scmp.eq.s32.totalorder %s44, 3
      %p401 = por %p399, %p400
      %p402 = scmp.ne.s32.totalorder %s393, %s394
      %p403 = scmp.eq.s32.totalorder %s44, 0
      %p404 = por %p402, %p403
      %p405 = scmp.ne.s32.totalorder %s393, %s394
      %p406 = scmp.eq.s32.totalorder %s45, 3
      %p407 = por %p405, %p406
      %p409 = scmp.ne.s32.totalorder %s394, %s408
      %p410 = scmp.eq.s32.totalorder %s45, 0
      %p411 = por %p409, %p410
      %s413 = sadd.s32 %s412, 1
      %p416 = scmp.eq.s32.totalorder %s39, 3
      %p417 = scmp.ne.s32.totalorder %s412, %s414
      %p418 = scmp.eq.s32.totalorder %s39, 0
      %p419 = por %p417, %p418
      %p420 = scmp.ne.s32.totalorder %s412, %s414
      %p421 = scmp.eq.s32.totalorder %s44, 3
      %p422 = por %p420, %p421
      %p423 = scmp.ne.s32.totalorder %s414, %s415
      %p424 = scmp.eq.s32.totalorder %s44, 0
      %p425 = por %p423, %p424
      %p426 = scmp.ne.s32.totalorder %s414, %s415
      %p427 = scmp.eq.s32.totalorder %s45, 3
      %p428 = por %p426, %p427
      %p430 = scmp.ne.s32.totalorder %s415, %s429
      %p431 = scmp.eq.s32.totalorder %s45, 0
      %p432 = por %p430, %p431
      %s434 = sadd.s32 %s433, 1
      %p437 = scmp.eq.s32.totalorder %s39, 3
      %p438 = scmp.ne.s32.totalorder %s433, %s435
      %p439 = scmp.eq.s32.totalorder %s39, 0
      %p440 = por %p438, %p439
      %p441 = scmp.ne.s32.totalorder %s433, %s435
      %p442 = scmp.eq.s32.totalorder %s44, 3
      %p443 = por %p441, %p442
      %p444 = scmp.ne.s32.totalorder %s435, %s436
      %p445 = scmp.eq.s32.totalorder %s44, 0
      %p446 = por %p444, %p445
      %p447 = scmp.ne.s32.totalorder %s435, %s436
      %p448 = scmp.eq.s32.totalorder %s45, 3
      %p449 = por %p447, %p448
      %p451 = scmp.ne.s32.totalorder %s436, %s450
      %p452 = scmp.eq.s32.totalorder %s45, 0
      %p453 = por %p451, %p452
      %s455 = sadd.s32 %s454, 1
      %p458 = scmp.eq.s32.totalorder %s39, 3
      %p459 = scmp.ne.s32.totalorder %s454, %s456
      %p460 = scmp.eq.s32.totalorder %s39, 0
      %p461 = por %p459, %p460
      %p462 = scmp.ne.s32.totalorder %s454, %s456
      %p463 = scmp.eq.s32.totalorder %s44, 3
      %p464 = por %p462, %p463
      %p465 = scmp.ne.s32.totalorder %s456, %s457
      %p466 = scmp.eq.s32.totalorder %s44, 0
      %p467 = por %p465, %p466
      %p468 = scmp.ne.s32.totalorder %s456, %s457
      %p469 = scmp.eq.s32.totalorder %s45, 3
      %p470 = por %p468, %p469
      %p472 = scmp.ne.s32.totalorder %s457, %s471
      %p473 = scmp.eq.s32.totalorder %s45, 0
      %p474 = por %p472, %p473
      %s476 = sadd.s32 %s475, 1
      %p479 = scmp.eq.s32.totalorder %s39, 3
      %p480 = scmp.ne.s32.totalorder %s475, %s477
      %p481 = scmp.eq.s32.totalorder %s39, 0
      %p482 = por %p480, %p481
      %p483 = scmp.ne.s32.totalorder %s475, %s477
      %p484 = scmp.eq.s32.totalorder %s44, 3
      %p485 = por %p483, %p484
      %p486 = scmp.ne.s32.totalorder %s477, %s478
      %p487 = scmp.eq.s32.totalorder %s44, 0
      %p488 = por %p486, %p487
      %p489 = scmp.ne.s32.totalorder %s477, %s478
      %p490 = scmp.eq.s32.totalorder %s45, 3
      %p491 = por %p489, %p490
      %p493 = scmp.ne.s32.totalorder %s478, %s492
      %p494 = scmp.eq.s32.totalorder %s45, 0
      %p495 = por %p493, %p494
      %s497 = sadd.s32 %s496, 1
      %p500 = scmp.eq.s32.totalorder %s39, 3
      %p501 = scmp.ne.s32.totalorder %s496, %s498
      %p502 = scmp.eq.s32.totalorder %s39, 0
      %p503 = por %p501, %p502
      %p504 = scmp.ne.s32.totalorder %s496, %s498
      %p505 = scmp.eq.s32.totalorder %s44, 3
      %p506 = por %p504, %p505
      %p507 = scmp.ne.s32.totalorder %s498, %s499
      %p508 = scmp.eq.s32.totalorder %s44, 0
      %p509 = por %p507, %p508
      %p510 = scmp.ne.s32.totalorder %s498, %s499
      %p511 = scmp.eq.s32.totalorder %s45, 3
      %p512 = por %p510, %p511
      %p514 = scmp.ne.s32.totalorder %s499, %s513
      %p515 = scmp.eq.s32.totalorder %s45, 0
      %p516 = por %p514, %p515
      %s518 = sadd.s32 %s517, 1
      %p521 = scmp.eq.s32.totalorder %s39, 3
      %p522 = scmp.ne.s32.totalorder %s517, %s519
      %p523 = scmp.eq.s32.totalorder %s39, 0
      %p524 = por %p522, %p523
      %p525 = scmp.ne.s32.totalorder %s517, %s519
      %p526 = scmp.eq.s32.totalorder %s44, 3
      %p527 = por %p525, %p526
      %p528 = scmp.ne.s32.totalorder %s519, %s520
      %p529 = scmp.eq.s32.totalorder %s44, 0
      %p530 = por %p528, %p529
      %p531 = scmp.ne.s32.totalorder %s519, %s520
      %p532 = scmp.eq.s32.totalorder %s45, 3
      %p533 = por %p531, %p532
      %p535 = scmp.ne.s32.totalorder %s520, %s534
      %p536 = scmp.eq.s32.totalorder %s45, 0
      %p537 = por %p535, %p536
      %s539 = sadd.s32 %s538, 1
      %p542 = scmp.eq.s32.totalorder %s39, 3
      %p543 = scmp.ne.s32.totalorder %s538, %s540
      %p544 = scmp.eq.s32.totalorder %s39, 0
      %p545 = por %p543, %p544
      %p546 = scmp.ne.s32.totalorder %s538, %s540
      %p547 = scmp.eq.s32.totalorder %s44, 3
      %p548 = por %p546, %p547
      %p549 = scmp.ne.s32.totalorder %s540, %s541
      %p550 = scmp.eq.s32.totalorder %s44, 0
      %p551 = por %p549, %p550
      %p552 = scmp.ne.s32.totalorder %s540, %s541
      %p553 = scmp.eq.s32.totalorder %s45, 3
      %p554 = por %p552, %p553
      %p556 = scmp.ne.s32.totalorder %s541, %s555
      %p557 = scmp.eq.s32.totalorder %s45, 0
      %p558 = por %p556, %p557
      %s559 = ssub.s32 %s46, %s58
      %s560 = ssub.s32 %s47, %s54
      %s561 = sor.u32 %s559, %s560
      %p562 = scmp.eq.s32.totalorder %s561, 0
      %s564 = sadd.s32 %s563, 1
      %s565 = scalar_select %p562, %s563, %s564
      %p568 = pneg %p562
      %p569 = scmp.eq.s32.totalorder %s39, 3
      %p570 = por %p568, %p569
      %p571 = scmp.ne.s32.totalorder %s563, %s566
      %p572 = scmp.eq.s32.totalorder %s39, 0
      %p573 = por %p571, %p572
      %p574 = scmp.ne.s32.totalorder %s563, %s566
      %p575 = scmp.eq.s32.totalorder %s44, 3
      %p576 = por %p574, %p575
      %p577 = scmp.ne.s32.totalorder %s566, %s567
      %p578 = scmp.eq.s32.totalorder %s44, 0
      %p579 = por %p577, %p578
      %p580 = scmp.ne.s32.totalorder %s566, %s567
      %p581 = scmp.eq.s32.totalorder %s45, 3
      %p582 = por %p580, %p581
      %p584 = scmp.ne.s32.totalorder %s567, %s583
      %p585 = scmp.eq.s32.totalorder %s45, 0
      %p586 = por %p584, %p585
      %p587 = scmp.le.s32.totalorder 1, %s39
      %p588 = scmp.lt.s32.totalorder %s39, 5
      %p589 = pnand %p587, %p588
      %p590 = pneg %p589
      // Predicated region
      $region9: #{tpu_custom_call.1} parent=5 // pred_check
        _
      $region10: #{tpu_custom_call.1} parent=5 // pred_check_branch
        %592 = sbr.rel (%p589) target = $region12
      $region11: #{tpu_custom_call.1} parent=5 // pred_region
        %s593 = ssub.s32 %s39, 1
        // Predicated region
        $region13: #{tpu_custom_call.1} parent=11 // pred_check
          %p594 = pneg %p152
        $region14: #{tpu_custom_call.1} parent=11 // pred_check_branch
          %596 = sbr.rel (%p594) target = $region16
        $region15: #{tpu_custom_call.1} parent=11 // pred_region
          %598 = vsyncadd [#allocation6], 0
          %s600 = sshll.u32 %s3, 4
          %s601 = int_to_ptr.hbm [resolvable:$true] %s600
          %s602 = sshll.u32 [#allocation5], 4
          %s603 = int_to_ptr.vmem [resolvable:$true] %s602
          %605 = dma.hbm_to_vmem [thread:$0]  %s601, 16, %s603, [#allocation6]
        $region16: #{tpu_custom_call.1} parent=11 // pred_fallthru
          _
        // Predicated region
        $region17: #{tpu_custom_call.1} parent=11 // pred_check
          %p606 = pneg %p173
        $region18: #{tpu_custom_call.1} parent=11 // pred_check_branch
          %608 = sbr.rel (%p606) target = $region20
        $region19: #{tpu_custom_call.1} parent=11 // pred_region
          %610 = vsyncadd [#allocation6], 0
          %s612 = sshll.u32 %s4, 4
          %s613 = int_to_ptr.hbm [resolvable:$true] %s612
          %s614 = sshll.u32 [#allocation7], 4
          %s615 = int_to_ptr.vmem [resolvable:$true] %s614
          %617 = dma.hbm_to_vmem [thread:$0]  %s613, 16, %s615, [#allocation6]
        $region20: #{tpu_custom_call.1} parent=11 // pred_fallthru
          _
        // Predicated region
        $region21: #{tpu_custom_call.1} parent=11 // pred_check
          %p618 = pneg %p194
        $region22: #{tpu_custom_call.1} parent=11 // pred_check_branch
          %620 = sbr.rel (%p618) target = $region24
        $region23: #{tpu_custom_call.1} parent=11 // pred_region
          _
        $region24: #{tpu_custom_call.1} parent=11 // pred_fallthru
          _
        // Predicated region
        $region25: #{tpu_custom_call.1} parent=11 // pred_check
          %p621 = pneg %p215
        $region26: #{tpu_custom_call.1} parent=11 // pred_check_branch
          %623 = sbr.rel (%p621) target = $region28
        $region27: #{tpu_custom_call.1} parent=11 // pred_region
          _
        $region28: #{tpu_custom_call.1} parent=11 // pred_fallthru
          _
        // Predicated region
        $region29: #{tpu_custom_call.1} parent=11 // pred_check
          %p624 = pneg %p236
        $region30: #{tpu_custom_call.1} parent=11 // pred_check_branch
          %626 = sbr.rel (%p624) target = $region32
        $region31: #{tpu_custom_call.1} parent=11 // pred_region
          %628 = vsyncadd [#allocation9], 0
          %s629 = sshll.u32 %s7, 4
          %s630 = int_to_ptr.hbm [resolvable:$true] %s629
          %s631 = sshll.u32 [#allocation8], 4
          %s632 = int_to_ptr.vmem [resolvable:$true] %s631
          %637 = dma.hbm_to_vmem [thread:$0]  %s630, 2048, %s632, [#allocation9], 128, 128, 8
        $region32: #{tpu_custom_call.1} parent=11 // pred_fallthru
          _
        // Predicated region
        $region33: #{tpu_custom_call.1} parent=11 // pred_check
          %p638 = pneg %p257
        $region34: #{tpu_custom_call.1} parent=11 // pred_check_branch
          %640 = sbr.rel (%p638) target = $region36
        $region35: #{tpu_custom_call.1} parent=11 // pred_region
          _
        $region36: #{tpu_custom_call.1} parent=11 // pred_fallthru
          _
        // Predicated region
        $region37: #{tpu_custom_call.1} parent=11 // pred_check
          %p641 = pneg %p278
        $region38: #{tpu_custom_call.1} parent=11 // pred_check_branch
          %643 = sbr.rel (%p641) target = $region40
        $region39: #{tpu_custom_call.1} parent=11 // pred_region
          %645 = vsyncadd [#allocation9], 0
          %s646 = sshll.u32 %s9, 4
          %s647 = int_to_ptr.hbm [resolvable:$true] %s646
          %s648 = sshll.u32 [#allocation10], 4
          %s649 = int_to_ptr.vmem [resolvable:$true] %s648
          %654 = dma.hbm_to_vmem [thread:$0]  %s647, 1024, %s649, [#allocation9], 64, 64, 4
        $region40: #{tpu_custom_call.1} parent=11 // pred_fallthru
          _
        // Predicated region
        $region41: #{tpu_custom_call.1} parent=11 // pred_check
          %p655 = pneg %p299
        $region42: #{tpu_custom_call.1} parent=11 // pred_check_branch
          %657 = sbr.rel (%p655) target = $region44
        $region43: #{tpu_custom_call.1} parent=11 // pred_region
          _
        $region44: #{tpu_custom_call.1} parent=11 // pred_fallthru
          _
        // Predicated region
        $region45: #{tpu_custom_call.1} parent=11 // pred_check
          %p658 = pneg %p320
        $region46: #{tpu_custom_call.1} parent=11 // pred_check_branch
          %660 = sbr.rel (%p658) target = $region48
        $region47: #{tpu_custom_call.1} parent=11 // pred_region
          _
        $region48: #{tpu_custom_call.1} parent=11 // pred_fallthru
          _
        // Predicated region
        $region49: #{tpu_custom_call.1} parent=11 // pred_check
          %p661 = pneg %p341
        $region50: #{tpu_custom_call.1} parent=11 // pred_check_branch
          %663 = sbr.rel (%p661) target = $region52
        $region51: #{tpu_custom_call.1} parent=11 // pred_region
          _
        $region52: #{tpu_custom_call.1} parent=11 // pred_fallthru
          _
        // Predicated region
        $region53: #{tpu_custom_call.1} parent=11 // pred_check
          %p664 = pneg %p362
        $region54: #{tpu_custom_call.1} parent=11 // pred_check_branch
          %666 = sbr.rel (%p664) target = $region56
        $region55: #{tpu_custom_call.1} parent=11 // pred_region
          %668 = vsyncadd [#allocation12], 0
          %s669 = sshll.u32 %s13, 4
          %s670 = int_to_ptr.hbm [resolvable:$true] %s669
          %s671 = sshll.u32 [#allocation11], 4
          %s672 = int_to_ptr.vmem [resolvable:$true] %s671
          %677 = dma.hbm_to_vmem [thread:$0]  %s670, 2048, %s672, [#allocation12], 128, 128, 8
        $region56: #{tpu_custom_call.1} parent=11 // pred_fallthru
          _
        // Predicated region
        $region57: #{tpu_custom_call.1} parent=11 // pred_check
          %p678 = pneg %p383
        $region58: #{tpu_custom_call.1} parent=11 // pred_check_branch
          %680 = sbr.rel (%p678) target = $region60
        $region59: #{tpu_custom_call.1} parent=11 // pred_region
          _
        $region60: #{tpu_custom_call.1} parent=11 // pred_fallthru
          _
        // Predicated region
        $region61: #{tpu_custom_call.1} parent=11 // pred_check
          %p681 = pneg %p404
        $region62: #{tpu_custom_call.1} parent=11 // pred_check_branch
          %683 = sbr.rel (%p681) target = $region64
        $region63: #{tpu_custom_call.1} parent=11 // pred_region
          %685 = vsyncadd [#allocation12], 0
          %s686 = sshll.u32 %s15, 4
          %s687 = int_to_ptr.hbm [resolvable:$true] %s686
          %s688 = sshll.u32 [#allocation13], 4
          %s689 = int_to_ptr.vmem [resolvable:$true] %s688
          %694 = dma.hbm_to_vmem [thread:$0]  %s687, 2048, %s689, [#allocation12], 64, 64, 4
        $region64: #{tpu_custom_call.1} parent=11 // pred_fallthru
          _
        // Predicated region
        $region65: #{tpu_custom_call.1} parent=11 // pred_check
          %p695 = pneg %p425
        $region66: #{tpu_custom_call.1} parent=11 // pred_check_branch
          %697 = sbr.rel (%p695) target = $region68
        $region67: #{tpu_custom_call.1} parent=11 // pred_region
          _
        $region68: #{tpu_custom_call.1} parent=11 // pred_fallthru
          _
        // Predicated region
        $region69: #{tpu_custom_call.1} parent=11 // pred_check
          %p698 = pneg %p446
        $region70: #{tpu_custom_call.1} parent=11 // pred_check_branch
          %700 = sbr.rel (%p698) target = $region72
        $region71: #{tpu_custom_call.1} parent=11 // pred_region
          _
        $region72: #{tpu_custom_call.1} parent=11 // pred_fallthru
          _
        // Predicated region
        $region73: #{tpu_custom_call.1} parent=11 // pred_check
          %p701 = pneg %p467
        $region74: #{tpu_custom_call.1} parent=11 // pred_check_branch
          %703 = sbr.rel (%p701) target = $region76
        $region75: #{tpu_custom_call.1} parent=11 // pred_region
          _
        $region76: #{tpu_custom_call.1} parent=11 // pred_fallthru
          _
        // Predicated region
        $region77: #{tpu_custom_call.1} parent=11 // pred_check
          %p704 = pneg %p488
        $region78: #{tpu_custom_call.1} parent=11 // pred_check_branch
          %706 = sbr.rel (%p704) target = $region80
        $region79: #{tpu_custom_call.1} parent=11 // pred_region
          _
        $region80: #{tpu_custom_call.1} parent=11 // pred_fallthru
          _
        // Predicated region
        $region81: #{tpu_custom_call.1} parent=11 // pred_check
          %p707 = pneg %p509
        $region82: #{tpu_custom_call.1} parent=11 // pred_check_branch
          %709 = sbr.rel (%p707) target = $region84
        $region83: #{tpu_custom_call.1} parent=11 // pred_region
          _
        $region84: #{tpu_custom_call.1} parent=11 // pred_fallthru
          _
        // Predicated region
        $region85: #{tpu_custom_call.1} parent=11 // pred_check
          %p710 = pneg %p530
        $region86: #{tpu_custom_call.1} parent=11 // pred_check_branch
          %712 = sbr.rel (%p710) target = $region88
        $region87: #{tpu_custom_call.1} parent=11 // pred_region
          %714 = vsyncadd [#allocation15], 0
          %s715 = sshll.u32 %s21, 4
          %s716 = int_to_ptr.hbm [resolvable:$true] %s715
          %s717 = sshll.u32 [#allocation14], 4
          %s718 = int_to_ptr.vmem [resolvable:$true] %s717
          %723 = dma.hbm_to_vmem [thread:$0]  %s716, 512, %s718, [#allocation15], 64, 64, 4
        $region88: #{tpu_custom_call.1} parent=11 // pred_fallthru
          _
        // Predicated region
        $region89: #{tpu_custom_call.1} parent=11 // pred_check
          %p724 = pneg %p551
        $region90: #{tpu_custom_call.1} parent=11 // pred_check_branch
          %726 = sbr.rel (%p724) target = $region92
        $region91: #{tpu_custom_call.1} parent=11 // pred_region
          _
        $region92: #{tpu_custom_call.1} parent=11 // pred_fallthru
          _
      $region12: #{tpu_custom_call.1} parent=5 // pred_fallthru
        _
      %p727 = scmp.lt.s32.totalorder %s39, 4
      // Predicated region
      $region93: #{tpu_custom_call.1} parent=5 // pred_check
        %p728 = pneg %p727
      $region94: #{tpu_custom_call.1} parent=5 // pred_check_branch
        %730 = sbr.rel (%p728) target = $region96
      $region95: #{tpu_custom_call.1} parent=5 // pred_region
        // Predicated region
        $region97: #{tpu_custom_call.1} parent=95 // pred_check
          %p731 = pneg %p73
        $region98: #{tpu_custom_call.1} parent=95 // pred_check_branch
          %733 = sbr.rel (%p731) target = $region100
        $region99: #{tpu_custom_call.1} parent=95 // pred_region
          %p734 = scmp.lt.s32.totalorder %s46, 1
          %s735 = scalar_select %p734, %s46, 1
          %p736 = scmp.lt.s32.totalorder %s47, 1
          %s737 = scalar_select %p736, %s47, 1
          %s738 = smul.addr %s735, 2
          %s739 = sadd.s32 %s737, %s738
          %s740 = smul.addr %s739, 8
          %s741 = scalar_lea.vmem %s0, %s740
        $region100: #{tpu_custom_call.1} parent=95 // pred_fallthru
          _
        // Predicated region
        $region101: #{tpu_custom_call.1} parent=95 // pred_check
          %p742 = pneg %p99
        $region102: #{tpu_custom_call.1} parent=95 // pred_check_branch
          %744 = sbr.rel (%p742) target = $region104
        $region103: #{tpu_custom_call.1} parent=95 // pred_region
          %s745 = sand.u32 %s89, 1
          %s746 = scalar_lea.sflag [#allocation3], %s745
          %s747 = sand.u32 %s89, 1
          %s748 = smul.addr %s747, 16
          %s749 = scalar_lea.vmem [#allocation2], %s748
          %751 = vsyncadd %s746, 0
          %s752 = smul.addr %s46, 2
          %s753 = smul.addr %s752, 8
          %s754 = scalar_lea.hbm %s1, %s753
          %s755 = sshll.u32 %s754, 4
          %s756 = int_to_ptr.hbm [resolvable:$true] %s755
          %s757 = sshll.u32 %s749, 4
          %s758 = int_to_ptr.vmem [resolvable:$true] %s757
          %763 = dma.hbm_to_vmem [thread:$0]  %s756, 256, %s758, %s746, 128, 128, 8
        $region104: #{tpu_custom_call.1} parent=95 // pred_fallthru
          _
        // Predicated region
        $region105: #{tpu_custom_call.1} parent=95 // pred_check
          %p764 = pneg %p125
        $region106: #{tpu_custom_call.1} parent=95 // pred_check_branch
          %766 = sbr.rel (%p764) target = $region108
        $region107: #{tpu_custom_call.1} parent=95 // pred_region
          %p767 = scmp.lt.s32.totalorder %s46, 1
          %s768 = scalar_select %p767, %s46, 1
          %s769 = scalar_lea.vmem %s2, %s768
        $region108: #{tpu_custom_call.1} parent=95 // pred_fallthru
          _
      $region96: #{tpu_custom_call.1} parent=5 // pred_fallthru
        _
      %p770 = scmp.le.s32.totalorder 1, %s39
      %p771 = scmp.lt.s32.totalorder %s39, 5
      %p772 = pnand %p770, %p771
      %p773 = pneg %p772
      // Predicated region
      $region109: #{tpu_custom_call.1} parent=5 // pred_check
        _
      $region110: #{tpu_custom_call.1} parent=5 // pred_check_branch
        %775 = sbr.rel (%p772) target = $region112
      $region111: #{tpu_custom_call.1} parent=5 // pred_region
        %s776 = ssub.s32 %s39, 1
        %s777 = sand.u32 %s92, 1
        %s778 = scalar_lea.sflag [#allocation3], %s777
        %s779 = sand.u32 %s92, 1
        %s780 = smul.addr %s779, 16
        %s781 = scalar_lea.vmem [#allocation2], %s780
        // Predicated region
        $region113: #{tpu_custom_call.1} parent=111 // pred_check
          %p782 = pneg %p105
        $region114: #{tpu_custom_call.1} parent=111 // pred_check_branch
          %784 = sbr.rel (%p782) target = $region116
        $region115: #{tpu_custom_call.1} parent=111 // pred_region
          %786 = dma.done %s778, 256
        $region116: #{tpu_custom_call.1} parent=111 // pred_fallthru
          _
        // Predicated region
        $region117: #{tpu_custom_call.1} parent=111 // pred_check
          %p787 = pneg %p152
        $region118: #{tpu_custom_call.1} parent=111 // pred_check_branch
          %789 = sbr.rel (%p787) target = $region120
        $region119: #{tpu_custom_call.1} parent=111 // pred_region
          %791 = dma.done [#allocation6], 16
        $region120: #{tpu_custom_call.1} parent=111 // pred_fallthru
          _
        // Predicated region
        $region121: #{tpu_custom_call.1} parent=111 // pred_check
          %p792 = pneg %p173
        $region122: #{tpu_custom_call.1} parent=111 // pred_check_branch
          %794 = sbr.rel (%p792) target = $region124
        $region123: #{tpu_custom_call.1} parent=111 // pred_region
          %796 = dma.done [#allocation6], 16
        $region124: #{tpu_custom_call.1} parent=111 // pred_fallthru
          _
        // Predicated region
        $region125: #{tpu_custom_call.1} parent=111 // pred_check
          %p797 = pneg %p236
        $region126: #{tpu_custom_call.1} parent=111 // pred_check_branch
          %799 = sbr.rel (%p797) target = $region128
        $region127: #{tpu_custom_call.1} parent=111 // pred_region
          %801 = dma.done [#allocation9], 2048
        $region128: #{tpu_custom_call.1} parent=111 // pred_fallthru
          _
        // Predicated region
        $region129: #{tpu_custom_call.1} parent=111 // pred_check
          %p802 = pneg %p278
        $region130: #{tpu_custom_call.1} parent=111 // pred_check_branch
          %804 = sbr.rel (%p802) target = $region132
        $region131: #{tpu_custom_call.1} parent=111 // pred_region
          %806 = dma.done [#allocation9], 1024
        $region132: #{tpu_custom_call.1} parent=111 // pred_fallthru
          _
        // Predicated region
        $region133: #{tpu_custom_call.1} parent=111 // pred_check
          %p807 = pneg %p362
        $region134: #{tpu_custom_call.1} parent=111 // pred_check_branch
          %809 = sbr.rel (%p807) target = $region136
        $region135: #{tpu_custom_call.1} parent=111 // pred_region
          %811 = dma.done [#allocation12], 2048
        $region136: #{tpu_custom_call.1} parent=111 // pred_fallthru
          _
        // Predicated region
        $region137: #{tpu_custom_call.1} parent=111 // pred_check
          %p812 = pneg %p404
        $region138: #{tpu_custom_call.1} parent=111 // pred_check_branch
          %814 = sbr.rel (%p812) target = $region140
        $region139: #{tpu_custom_call.1} parent=111 // pred_region
          %816 = dma.done [#allocation12], 2048
        $region140: #{tpu_custom_call.1} parent=111 // pred_fallthru
          _
        // Predicated region
        $region141: #{tpu_custom_call.1} parent=111 // pred_check
          %p817 = pneg %p530
        $region142: #{tpu_custom_call.1} parent=111 // pred_check_branch
          %819 = sbr.rel (%p817) target = $region144
        $region143: #{tpu_custom_call.1} parent=111 // pred_region
          %821 = dma.done [#allocation15], 512
        $region144: #{tpu_custom_call.1} parent=111 // pred_fallthru
          _
        %p822 = scmp.lt.s32.totalorder %s48, 1
        %s823 = scalar_select %p822, %s48, 1
        %p824 = scmp.lt.s32.totalorder %s49, 1
        %s825 = scalar_select %p824, %s49, 1
        %s826 = smul.addr %s823, 2
        %s827 = sadd.s32 %s825, %s826
        %s828 = smul.addr %s827, 8
        %s829 = scalar_lea.vmem %s0, %s828
        %p830 = pneg %p79
        %p831 = pneg %p76
        %s832 = sand.u32 %s92, 1
        %s833 = scalar_lea.sflag [#allocation3], %s832
        %s834 = sand.u32 %s92, 1
        %s835 = smul.addr %s834, 16
        %s836 = scalar_lea.vmem [#allocation2], %s835
        %p837 = pneg %p105
        %p838 = pneg %p102
        %p839 = scmp.lt.s32.totalorder %s48, 1
        %s840 = scalar_select %p839, %s48, 1
        %s841 = scalar_lea.vmem %s2, %s840
        %p842 = pneg %p131
        %p843 = pneg %p128
        %p844 = pneg %p152
        %p845 = pneg %p149
        %p846 = pneg %p173
        %p847 = pneg %p170
        %p848 = pneg %p194
        %p849 = pneg %p191
        %p850 = pneg %p215
        %p851 = pneg %p212
        %p852 = pneg %p236
        %p853 = pneg %p233
        %p854 = pneg %p257
        %p855 = pneg %p254
        %p856 = pneg %p278
        %p857 = pneg %p275
        %p858 = pneg %p299
        %p859 = pneg %p296
        %p860 = pneg %p320
        %p861 = pneg %p317
        %p862 = pneg %p341
        %p863 = pneg %p338
        %p864 = pneg %p362
        %p865 = pneg %p359
        %p866 = pneg %p383
        %p867 = pneg %p380
        %p868 = pneg %p404
        %p869 = pneg %p401
        %p870 = pneg %p425
        %p871 = pneg %p422
        %p872 = pneg %p446
        %p873 = pneg %p443
        %p874 = pneg %p467
        %p875 = pneg %p464
        %p876 = pneg %p488
        %p877 = pneg %p485
        %p878 = pneg %p509
        %p879 = pneg %p506
        %p880 = pneg %p530
        %p881 = pneg %p527
        %p882 = pneg %p551
        %p883 = pneg %p548
        %p884 = pneg %p579
        %p885 = pneg %p576
        %s886 = sand.u32 %s566, 1
        %s887 = scalar_lea.sflag [#allocation4], %s886
        %s888 = sand.u32 %s566, 1
        %s889 = smul.addr %s888, 8
        %s890 = scalar_lea.vmem [#allocation16], %s889
        %p891 = scmp.lt.s32.totalorder %s48, 1
        %s892 = scalar_select %p891, %s48, 1
        %p893 = scmp.lt.s32.totalorder %s49, 1
        %s894 = scalar_select %p893, %s49, 1
        %s895 = smul.addr %s892, 2
        %s896 = sadd.s32 %s894, %s895
        %s897 = smul.addr %s896, 8
        %s898 = scalar_lea.vmem %s0, %s897
        %p899 = scmp.lt.s32.totalorder %s48, 1
        %s900 = scalar_select %p899, %s48, 1
        %s901 = scalar_lea.vmem %s2, %s900
        %v903 = vld [vmem:[%s898] sm:$0xff]
        %v904 = vld [vmem:[%s781] sm:$0xff]
        %v905 = vld [vmem:[%s781 + $0x8] sm:$0xff]
        %v906 = vld [vmem:[%s901] sm:$0x1]
        %v907 = vld [vmem:[#allocation5] sm:$0x1]
        %v908 = vld [vmem:[#allocation7] sm:$0x1]
        %909 = vadd.xlane.f32.xlu0 %v903
        %v910 = vpop.xlane.xlu0 %909
        %v911 = vrcp.pop 128.0
        %v912 = vmul.f32 128.0, %v911
        %v913 = vsub.f32 1.0, %v912
        %v914 = vmul.f32 %v911, %v913
        %v915 = vadd.f32 %v911, %v914
        %vm916 = vweird.f32 %v911
        %v917 = vsel %vm916, %v911, %v915
        %v918 = vmul.f32 %v910, %v917
        %v919 = vsub.f32 %v903, %v918
        %v920 = vmul.f32 %v919, %v919
        %921 = vadd.xlane.f32.xlu0 %v920
        %v922 = vpop.xlane.xlu0 %921
        %v923 = vmul.f32 %v922, %v917
        %v924 = vadd.f32 %v923, 1e-06
        %v925 = vrsqrt.pop %v924
        %v926 = vmul.f32 %v925, %v924
        %v927 = vmul.f32 %v926, %v925
        %v928 = vmul.f32 0.5, %v927
        %v929 = vsub.f32 1.5, %v928
        %v930 = vmul.f32 %v925, %v929
        %vm931 = vweird.f32 %v924
        %vm932 = vweird.f32 %v925
        %vm933 = vmor %vm931, %vm932
        %v934 = vsel %vm933, %v925, %v930
        %v935 = vmul.f32 %v919, %v934
        %v937 = vperm.slane %v907, 0
        %v939 = vmul.f32 %v935, %v937
        %v941 = vperm.slane %v908, 0
        %v943 = vadd.f32 %v939, %v941
        %v944 = vpack.c.bf16 %v943, %v943
        %945 = vadd.xlane.f32.xlu0 %v904
        %v946 = vpop.xlane.xlu0 %945
        %947 = vadd.xlane.f32.xlu0 %v905
        %v948 = vpop.xlane.xlu0 %947
        %v949 = vmul.f32 %v946, %v917
        %v950 = vmul.f32 %v948, %v917
        %v951 = vsub.f32 %v904, %v949
        %v952 = vsub.f32 %v905, %v950
        %v953 = vmul.f32 %v951, %v951
        %v954 = vmul.f32 %v952, %v952
        %955 = vadd.xlane.f32.xlu0 %v953
        %v956 = vpop.xlane.xlu0 %955
        %957 = vadd.xlane.f32.xlu0 %v954
        %v958 = vpop.xlane.xlu0 %957
        %v959 = vmul.f32 %v956, %v917
        %v960 = vmul.f32 %v958, %v917
        %v961 = vadd.f32 %v959, 1e-06
        %v962 = vadd.f32 %v960, 1e-06
        %v963 = vrsqrt.pop %v961
        %v964 = vmul.f32 %v963, %v961
        %v965 = vmul.f32 %v964, %v963
        %v966 = vmul.f32 0.5, %v965
        %v967 = vsub.f32 1.5, %v966
        %v968 = vmul.f32 %v963, %v967
        %vm969 = vweird.f32 %v961
        %vm970 = vweird.f32 %v963
        %vm971 = vmor %vm969, %vm970
        %v972 = vsel %vm971, %v963, %v968
        %v973 = vrsqrt.pop %v962
        %v974 = vmul.f32 %v973, %v962
        %v975 = vmul.f32 %v974, %v973
        %v976 = vmul.f32 0.5, %v975
        %v977 = vsub.f32 1.5, %v976
        %v978 = vmul.f32 %v973, %v977
        %vm979 = vweird.f32 %v962
        %vm980 = vweird.f32 %v973
        %vm981 = vmor %vm979, %vm980
        %v982 = vsel %vm981, %v973, %v978
        %v983 = vmul.f32 %v951, %v972
        %v984 = vmul.f32 %v952, %v982
        %v985 = vmul.f32 %v983, %v937
        %v986 = vmul.f32 %v984, %v937
        %v987 = vadd.f32 %v985, %v941
        %v988 = vadd.f32 %v986, %v941
        %v989 = vpack.c.bf16 %v988, %v987
        %v990 = vld [vmem:[%s5] sm:$0xf]
        %v991 = vld [vmem:[%s5 + $0x4] sm:$0xf]
        %v992 = vld [vmem:[%s5 + $0x8] sm:$0xf]
        %v993 = vld [vmem:[%s5 + $0xc] sm:$0xf]
        %v994 = vld [vmem:[%s5 + $0x10] sm:$0xf]
        %v995 = vld [vmem:[%s5 + $0x14] sm:$0xf]
        %v996 = vld [vmem:[%s5 + $0x18] sm:$0xf]
        %v997 = vld [vmem:[%s5 + $0x1c] sm:$0xf]
        %v998 = vld [vmem:[%s5 + $0x20] sm:$0xf]
        %v999 = vld [vmem:[%s5 + $0x24] sm:$0xf]
        %v1000 = vld [vmem:[%s5 + $0x28] sm:$0xf]
        %v1001 = vld [vmem:[%s5 + $0x2c] sm:$0xf]
        %v1002 = vld [vmem:[%s5 + $0x30] sm:$0xf]
        %v1003 = vld [vmem:[%s5 + $0x34] sm:$0xf]
        %v1004 = vld [vmem:[%s5 + $0x38] sm:$0xf]
        %v1005 = vld [vmem:[%s5 + $0x3c] sm:$0xf]
        %v1006 = vld [vmem:[%s6] sm:$0x1]
        %v1008 = vperm.slane %v1006, 0
        %v1026 = vunpack.c.l.b16 %v990
        %v1027 = vunpack.c.l.b16 %v991
        %v1028 = vunpack.c.l.b16 %v992
        %v1029 = vunpack.c.l.b16 %v993
        %v1030 = vunpack.c.l.b16 %v994
        %v1031 = vunpack.c.l.b16 %v995
        %v1032 = vunpack.c.l.b16 %v996
        %v1033 = vunpack.c.l.b16 %v997
        %v1034 = vunpack.c.l.b16 %v998
        %v1035 = vunpack.c.l.b16 %v999
        %v1036 = vunpack.c.l.b16 %v1000
        %v1037 = vunpack.c.l.b16 %v1001
        %v1038 = vunpack.c.l.b16 %v1002
        %v1039 = vunpack.c.l.b16 %v1003
        %v1040 = vunpack.c.l.b16 %v1004
        %v1041 = vunpack.c.l.b16 %v1005
        %v1042 = vpack.c.b16 %v1027, %v1026
        %v1043 = vpack.c.b16 %v1029, %v1028
        %v1044 = vpack.c.b16 %v1031, %v1030
        %v1045 = vpack.c.b16 %v1033, %v1032
        %v1046 = vpack.c.b16 %v1035, %v1034
        %v1047 = vpack.c.b16 %v1037, %v1036
        %v1048 = vpack.c.b16 %v1039, %v1038
        %v1049 = vpack.c.b16 %v1041, %v1040
        %1058 = vmatpush.bf16.msra.mxu0 %v1049
        %1059 = vmatpush.bf16.msra.mxu0 %v1048
        %1060 = vmatpush.bf16.msra.mxu0 %v1047
        %1061 = vmatpush.bf16.msra.mxu0 %v1046
        %1062 = vmatpush.bf16.msra.mxu0 %v1045
        %1063 = vmatpush.bf16.msra.mxu0 %v1044
        %1064 = vmatpush.bf16.msra.mxu0 %v1043
        %1065 = vmatpush.bf16.msra.mxu0 %v1042
        %1066 = vmatmul.bf16.gmra.mxu0 %v944
        %v1067 = vpop.f32.mrf.mxu0
        %v1068 = vadd.f32 %v1008, %v1067
        %v1069 = vpop.f32.mrf.mxu0
        %1070 = vdwg.mxu0
        %v1071 = vld [vmem:[#allocation8] sm:$0xff]
        %v1072 = vld [vmem:[#allocation8 + $0x8] sm:$0xff]
        %v1073 = vld [vmem:[#allocation8 + $0x10] sm:$0xff]
        %v1074 = vld [vmem:[#allocation8 + $0x18] sm:$0xff]
        %v1075 = vld [vmem:[#allocation8 + $0x20] sm:$0xff]
        %v1076 = vld [vmem:[#allocation8 + $0x28] sm:$0xff]
        %v1077 = vld [vmem:[#allocation8 + $0x30] sm:$0xff]
        %v1078 = vld [vmem:[#allocation8 + $0x38] sm:$0xff]
        %v1079 = vld [vmem:[#allocation8 + $0x40] sm:$0xff]
        %v1080 = vld [vmem:[#allocation8 + $0x48] sm:$0xff]
        %v1081 = vld [vmem:[#allocation8 + $0x50] sm:$0xff]
        %v1082 = vld [vmem:[#allocation8 + $0x58] sm:$0xff]
        %v1083 = vld [vmem:[#allocation8 + $0x60] sm:$0xff]
        %v1084 = vld [vmem:[#allocation8 + $0x68] sm:$0xff]
        %v1085 = vld [vmem:[#allocation8 + $0x70] sm:$0xff]
        %v1086 = vld [vmem:[#allocation8 + $0x78] sm:$0xff]
        %v1087 = vld [vmem:[%s8] sm:$0x3]
        %v1089 = vperm.slane %v1087, 0
        %v1090 = vperm.slane %v1087, 1
        %v1109 = vunpack.c.l.b16 %v1071
        %v1110 = vunpack.c.h.b16 %v1071
        %v1111 = vunpack.c.l.b16 %v1072
        %v1112 = vunpack.c.h.b16 %v1072
        %v1113 = vunpack.c.l.b16 %v1073
        %v1114 = vunpack.c.h.b16 %v1073
        %v1115 = vunpack.c.l.b16 %v1074
        %v1116 = vunpack.c.h.b16 %v1074
        %v1117 = vunpack.c.l.b16 %v1075
        %v1118 = vunpack.c.h.b16 %v1075
        %v1119 = vunpack.c.l.b16 %v1076
        %v1120 = vunpack.c.h.b16 %v1076
        %v1121 = vunpack.c.l.b16 %v1077
        %v1122 = vunpack.c.h.b16 %v1077
        %v1123 = vunpack.c.l.b16 %v1078
        %v1124 = vunpack.c.h.b16 %v1078
        %v1125 = vunpack.c.l.b16 %v1079
        %v1126 = vunpack.c.h.b16 %v1079
        %v1127 = vunpack.c.l.b16 %v1080
        %v1128 = vunpack.c.h.b16 %v1080
        %v1129 = vunpack.c.l.b16 %v1081
        %v1130 = vunpack.c.h.b16 %v1081
        %v1131 = vunpack.c.l.b16 %v1082
        %v1132 = vunpack.c.h.b16 %v1082
        %v1133 = vunpack.c.l.b16 %v1083
        %v1134 = vunpack.c.h.b16 %v1083
        %v1135 = vunpack.c.l.b16 %v1084
        %v1136 = vunpack.c.h.b16 %v1084
        %v1137 = vunpack.c.l.b16 %v1085
        %v1138 = vunpack.c.h.b16 %v1085
        %v1139 = vunpack.c.l.b16 %v1086
        %v1140 = vunpack.c.h.b16 %v1086
        %v1141 = vpack.c.b16 %v1111, %v1109
        %v1142 = vpack.c.b16 %v1112, %v1110
        %v1143 = vpack.c.b16 %v1115, %v1113
        %v1144 = vpack.c.b16 %v1116, %v1114
        %v1145 = vpack.c.b16 %v1119, %v1117
        %v1146 = vpack.c.b16 %v1120, %v1118
        %v1147 = vpack.c.b16 %v1123, %v1121
        %v1148 = vpack.c.b16 %v1124, %v1122
        %v1149 = vpack.c.b16 %v1127, %v1125
        %v1150 = vpack.c.b16 %v1128, %v1126
        %v1151 = vpack.c.b16 %v1131, %v1129
        %v1152 = vpack.c.b16 %v1132, %v1130
        %v1153 = vpack.c.b16 %v1135, %v1133
        %v1154 = vpack.c.b16 %v1136, %v1134
        %v1155 = vpack.c.b16 %v1139, %v1137
        %v1156 = vpack.c.b16 %v1140, %v1138
        %1173 = vmatpush.bf16.msra.mxu0 %v1155
        %1174 = vmatpush.bf16.msra.mxu0 %v1153
        %1175 = vmatpush.bf16.msra.mxu0 %v1151
        %1176 = vmatpush.bf16.msra.mxu0 %v1149
        %1177 = vmatpush.bf16.msra.mxu0 %v1147
        %1178 = vmatpush.bf16.msra.mxu0 %v1145
        %1179 = vmatpush.bf16.msra.mxu0 %v1143
        %1180 = vmatpush.bf16.msra.mxu0 %v1141
        %1181 = vmatmul.bf16.gmra.mxu0 %v989
        %v1182 = vpop.f32.mrf.mxu0
        %v1183 = vadd.f32 %v1089, %v1182
        %v1184 = vpop.f32.mrf.mxu0
        %v1185 = vadd.f32 %v1089, %v1184
        %1186 = vdwg.mxu0
        %1187 = vmatpush.bf16.msra.mxu0 %v1156
        %1188 = vmatpush.bf16.msra.mxu0 %v1154
        %1189 = vmatpush.bf16.msra.mxu0 %v1152
        %1190 = vmatpush.bf16.msra.mxu0 %v1150
        %1191 = vmatpush.bf16.msra.mxu0 %v1148
        %1192 = vmatpush.bf16.msra.mxu0 %v1146
        %1193 = vmatpush.bf16.msra.mxu0 %v1144
        %1194 = vmatpush.bf16.msra.mxu0 %v1142
        %1195 = vmatmul.bf16.gmra.mxu0 %v989
        %v1196 = vpop.f32.mrf.mxu0
        %v1197 = vadd.f32 %v1090, %v1196
        %v1198 = vpop.f32.mrf.mxu0
        %v1199 = vadd.f32 %v1090, %v1198
        %1200 = vdwg.mxu0
        %v1201 = vpack.c.bf16 %v1068, %v1068
        %v1202 = vpack.c.bf16 %v1183, %v1183
        %v1203 = vpack.c.bf16 %v1185, %v1185
        %v1204 = vpack.c.bf16 %v1197, %v1197
        %v1205 = vpack.c.bf16 %v1199, %v1199
        %vm1206 = vcmp.gt.f32.partialorder %v906, 0.0
        %v1207 = vsel %vm1206, 1, 0
        %v1208 = vperm.slane %v1207, 0
        %vm1209 = vcmp.eq.s32.totalorder %v1208, 1
        %v1212 = vunpack.c.l.b16 %v1202
        %v1213 = vunpack.c.l.b16 %v1203
        %v1214 = vpack.c.b16 %v1213, %v1212
        %vm1215 = vcmask 261120
        %v1217 = vsel %vm1215, %v1201, 0
        %v1220 = vsel %vm1215, %v1214, 0
        %1222 = vmatpush.bf16.xpose.msra.mxu0 0
        %1223 = vmatpush.bf16.xpose.msra.mxu0 0
        %1224 = vmatpush.bf16.xpose.msra.mxu0 0
        %1225 = vmatpush.bf16.xpose.msra.mxu0 0
        %1226 = vmatpush.bf16.xpose.msra.mxu0 0
        %1227 = vmatpush.bf16.xpose.msra.mxu0 0
        %1228 = vmatpush.bf16.xpose.msra.mxu0 0
        %1229 = vmatpush.bf16.xpose.msra.mxu0 %v1220
        %1230 = vmatmul.bf16.gmra.mxu0 %v1217
        %v1231 = vpop.f32.mrf.mxu0
        %v1232 = vadd.f32 0.0, %v1231
        %v1233 = vpop.f32.mrf.mxu0
        %1234 = vdwg.mxu0
        %v1235 = vmul.f32 %v1232, 0.17677669
        %v1236 = vsel %vm1209, %v1235, -1e+09
        %vm1237 = vcmask 130048
        %v1238 = vsel %vm1237, %v1236, -inf
        %1239 = vmax.xlane.f32.xlu0 %v1238
        %v1240 = vpop.xlane.xlu0 %1239
        %v1241 = vsub.f32 %v1236, %v1240
        %v1242 = vmul.f32 %v1241, 1.442695
        %v1243 = vpow.pop %v1242
        %v1244 = vsel %vm1237, %v1243, 0.0
        %1245 = vadd.xlane.f32.xlu0 %v1244
        %v1246 = vpop.xlane.xlu0 %1245
        %v1247 = vrcp.pop %v1246
        %v1248 = vmul.f32 %v1243, %v1247
        %v1249 = vpack.c.bf16 %v1248, %v1248
        %v1252 = vunpack.c.l.b16 %v1204
        %v1253 = vunpack.c.l.b16 %v1205
        %v1254 = vpack.c.b16 %v1253, %v1252
        %v1257 = vsel %vm1237, %v1249, 0
        %1259 = vmatpush.bf16.msra.mxu0 0
        %1260 = vmatpush.bf16.msra.mxu0 0
        %1261 = vmatpush.bf16.msra.mxu0 0
        %1262 = vmatpush.bf16.msra.mxu0 0
        %1263 = vmatpush.bf16.msra.mxu0 0
        %1264 = vmatpush.bf16.msra.mxu0 0
        %1265 = vmatpush.bf16.msra.mxu0 0
        %1266 = vmatpush.bf16.msra.mxu0 %v1254
        %1267 = vmatmul.bf16.gmra.mxu0 %v1257
        %v1268 = vpop.f32.mrf.mxu0
        %v1269 = vadd.f32 0.0, %v1268
        %v1270 = vpop.f32.mrf.mxu0
        %1271 = vdwg.mxu0
        %v1273 = vunpack.c.l.b16 %v1201
        %v1274 = vpack.c.b16 %v1273, %v1273
        %1275 = vrot.lane.b32.xlu0 %v1274, 96
        %v1276 = vpop.permute.xlu0 %1275
        %1277 = vrot.lane.b32.xlu0 %v1214, 96
        %v1278 = vpop.permute.xlu0 %1277
        %v1280 = vsel %vm1215, %v1276, 0
        %v1283 = vsel %vm1215, %v1278, 0
        %1285 = vmatpush.bf16.xpose.msra.mxu0 0
        %1286 = vmatpush.bf16.xpose.msra.mxu0 0
        %1287 = vmatpush.bf16.xpose.msra.mxu0 0
        %1288 = vmatpush.bf16.xpose.msra.mxu0 0
        %1289 = vmatpush.bf16.xpose.msra.mxu0 0
        %1290 = vmatpush.bf16.xpose.msra.mxu0 0
        %1291 = vmatpush.bf16.xpose.msra.mxu0 0
        %1292 = vmatpush.bf16.xpose.msra.mxu0 %v1283
        %1293 = vmatmul.bf16.gmra.mxu0 %v1280
        %v1294 = vpop.f32.mrf.mxu0
        %v1295 = vadd.f32 0.0, %v1294
        %v1296 = vpop.f32.mrf.mxu0
        %1297 = vdwg.mxu0
        %v1298 = vmul.f32 %v1295, 0.17677669
        %v1299 = vsel %vm1209, %v1298, -1e+09
        %v1300 = vsel %vm1237, %v1299, -inf
        %1301 = vmax.xlane.f32.xlu0 %v1300
        %v1302 = vpop.xlane.xlu0 %1301
        %v1303 = vsub.f32 %v1299, %v1302
        %v1304 = vmul.f32 %v1303, 1.442695
        %v1305 = vpow.pop %v1304
        %v1306 = vsel %vm1237, %v1305, 0.0
        %1307 = vadd.xlane.f32.xlu0 %v1306
        %v1308 = vpop.xlane.xlu0 %1307
        %v1309 = vrcp.pop %v1308
        %v1310 = vmul.f32 %v1305, %v1309
        %v1311 = vpack.c.bf16 %v1310, %v1310
        %1312 = vrot.lane.b32.xlu0 %v1254, 96
        %v1313 = vpop.permute.xlu0 %1312
        %v1316 = vsel %vm1237, %v1311, 0
        %1318 = vmatpush.bf16.msra.mxu0 0
        %1319 = vmatpush.bf16.msra.mxu0 0
        %1320 = vmatpush.bf16.msra.mxu0 0
        %1321 = vmatpush.bf16.msra.mxu0 0
        %1322 = vmatpush.bf16.msra.mxu0 0
        %1323 = vmatpush.bf16.msra.mxu0 0
        %1324 = vmatpush.bf16.msra.mxu0 0
        %1325 = vmatpush.bf16.msra.mxu0 %v1313
        %1326 = vmatmul.bf16.gmra.mxu0 %v1316
        %v1327 = vpop.f32.mrf.mxu0
        %v1328 = vadd.f32 0.0, %v1327
        %v1329 = vpop.f32.mrf.mxu0
        %1330 = vdwg.mxu0
        %1331 = vrot.lane.b32.xlu0 %v1274, 64
        %v1332 = vpop.permute.xlu0 %1331
        %1333 = vrot.lane.b32.xlu0 %v1214, 64
        %v1334 = vpop.permute.xlu0 %1333
        %v1336 = vsel %vm1215, %v1332, 0
        %v1339 = vsel %vm1215, %v1334, 0
        %1341 = vmatpush.bf16.xpose.msra.mxu0 0
        %1342 = vmatpush.bf16.xpose.msra.mxu0 0
        %1343 = vmatpush.bf16.xpose.msra.mxu0 0
        %1344 = vmatpush.bf16.xpose.msra.mxu0 0
        %1345 = vmatpush.bf16.xpose.msra.mxu0 0
        %1346 = vmatpush.bf16.xpose.msra.mxu0 0
        %1347 = vmatpush.bf16.xpose.msra.mxu0 0
        %1348 = vmatpush.bf16.xpose.msra.mxu0 %v1339
        %1349 = vmatmul.bf16.gmra.mxu0 %v1336
        %v1350 = vpop.f32.mrf.mxu0
        %v1351 = vadd.f32 0.0, %v1350
        %v1352 = vpop.f32.mrf.mxu0
        %1353 = vdwg.mxu0
        %v1354 = vmul.f32 %v1351, 0.17677669
        %v1355 = vsel %vm1209, %v1354, -1e+09
        %v1356 = vsel %vm1237, %v1355, -inf
        %1357 = vmax.xlane.f32.xlu0 %v1356
        %v1358 = vpop.xlane.xlu0 %1357
        %v1359 = vsub.f32 %v1355, %v1358
        %v1360 = vmul.f32 %v1359, 1.442695
        %v1361 = vpow.pop %v1360
        %v1362 = vsel %vm1237, %v1361, 0.0
        %1363 = vadd.xlane.f32.xlu0 %v1362
        %v1364 = vpop.xlane.xlu0 %1363
        %v1365 = vrcp.pop %v1364
        %v1366 = vmul.f32 %v1361, %v1365
        %v1367 = vpack.c.bf16 %v1366, %v1366
        %1368 = vrot.lane.b32.xlu0 %v1254, 64
        %v1369 = vpop.permute.xlu0 %1368
        %v1372 = vsel %vm1237, %v1367, 0
        %1374 = vmatpush.bf16.msra.mxu0 0
        %1375 = vmatpush.bf16.msra.mxu0 0
        %1376 = vmatpush.bf16.msra.mxu0 0
        %1377 = vmatpush.bf16.msra.mxu0 0
        %1378 = vmatpush.bf16.msra.mxu0 0
        %1379 = vmatpush.bf16.msra.mxu0 0
        %1380 = vmatpush.bf16.msra.mxu0 0
        %1381 = vmatpush.bf16.msra.mxu0 %v1369
        %1382 = vmatmul.bf16.gmra.mxu0 %v1372
        %v1383 = vpop.f32.mrf.mxu0
        %v1384 = vadd.f32 0.0, %v1383
        %v1385 = vpop.f32.mrf.mxu0
        %1386 = vdwg.mxu0
        %1387 = vrot.lane.b32.xlu0 %v1274, 32
        %v1388 = vpop.permute.xlu0 %1387
        %1389 = vrot.lane.b32.xlu0 %v1214, 32
        %v1390 = vpop.permute.xlu0 %1389
        %v1392 = vsel %vm1215, %v1388, 0
        %v1395 = vsel %vm1215, %v1390, 0
        %1397 = vmatpush.bf16.xpose.msra.mxu0 0
        %1398 = vmatpush.bf16.xpose.msra.mxu0 0
        %1399 = vmatpush.bf16.xpose.msra.mxu0 0
        %1400 = vmatpush.bf16.xpose.msra.mxu0 0
        %1401 = vmatpush.bf16.xpose.msra.mxu0 0
        %1402 = vmatpush.bf16.xpose.msra.mxu0 0
        %1403 = vmatpush.bf16.xpose.msra.mxu0 0
        %1404 = vmatpush.bf16.xpose.msra.mxu0 %v1395
        %1405 = vmatmul.bf16.gmra.mxu0 %v1392
        %v1406 = vpop.f32.mrf.mxu0
        %v1407 = vadd.f32 0.0, %v1406
        %v1408 = vpop.f32.mrf.mxu0
        %1409 = vdwg.mxu0
        %v1410 = vmul.f32 %v1407, 0.17677669
        %v1411 = vsel %vm1209, %v1410, -1e+09
        %v1412 = vsel %vm1237, %v1411, -inf
        %1413 = vmax.xlane.f32.xlu0 %v1412
        %v1414 = vpop.xlane.xlu0 %1413
        %v1415 = vsub.f32 %v1411, %v1414
        %v1416 = vmul.f32 %v1415, 1.442695
        %v1417 = vpow.pop %v1416
        %v1418 = vsel %vm1237, %v1417, 0.0
        %1419 = vadd.xlane.f32.xlu0 %v1418
        %v1420 = vpop.xlane.xlu0 %1419
        %v1421 = vrcp.pop %v1420
        %v1422 = vmul.f32 %v1417, %v1421
        %v1423 = vpack.c.bf16 %v1422, %v1422
        %1424 = vrot.lane.b32.xlu0 %v1254, 32
        %v1425 = vpop.permute.xlu0 %1424
        %v1428 = vsel %vm1237, %v1423, 0
        %1430 = vmatpush.bf16.msra.mxu0 0
        %1431 = vmatpush.bf16.msra.mxu0 0
        %1432 = vmatpush.bf16.msra.mxu0 0
        %1433 = vmatpush.bf16.msra.mxu0 0
        %1434 = vmatpush.bf16.msra.mxu0 0
        %1435 = vmatpush.bf16.msra.mxu0 0
        %1436 = vmatpush.bf16.msra.mxu0 0
        %1437 = vmatpush.bf16.msra.mxu0 %v1425
        %1438 = vmatmul.bf16.gmra.mxu0 %v1428
        %v1439 = vpop.f32.mrf.mxu0
        %v1440 = vadd.f32 0.0, %v1439
        %v1441 = vpop.f32.mrf.mxu0
        %1442 = vdwg.mxu0
        %1444 = vrot.lane.b32.xlu0 %v1328, 32
        %v1445 = vpop.permute.xlu0 %1444
        %1448 = vrot.lane.b32.xlu0 %v1384, 64
        %v1449 = vpop.permute.xlu0 %1448
        %1452 = vrot.lane.b32.xlu0 %v1440, 96
        %v1453 = vpop.permute.xlu0 %1452
        %v1455 = vsel %vm1215, %v1269, %v1445
        %vm1456 = vcmask 523264
        %v1457 = vsel %vm1456, %v1455, %v1449
        %vm1458 = vcmask 785408
        %v1459 = vsel %vm1458, %v1457, %v1453
        %v1460 = vpack.c.bf16 %v1459, %v1459
        %v1461 = vld [vmem:[#allocation10] sm:$0xf]
        %v1462 = vld [vmem:[#allocation10 + $0x4] sm:$0xf]
        %v1463 = vld [vmem:[#allocation10 + $0x8] sm:$0xf]
        %v1464 = vld [vmem:[#allocation10 + $0xc] sm:$0xf]
        %v1465 = vld [vmem:[#allocation10 + $0x10] sm:$0xf]
        %v1466 = vld [vmem:[#allocation10 + $0x14] sm:$0xf]
        %v1467 = vld [vmem:[#allocation10 + $0x18] sm:$0xf]
        %v1468 = vld [vmem:[#allocation10 + $0x1c] sm:$0xf]
        %v1469 = vld [vmem:[#allocation10 + $0x20] sm:$0xf]
        %v1470 = vld [vmem:[#allocation10 + $0x24] sm:$0xf]
        %v1471 = vld [vmem:[#allocation10 + $0x28] sm:$0xf]
        %v1472 = vld [vmem:[#allocation10 + $0x2c] sm:$0xf]
        %v1473 = vld [vmem:[#allocation10 + $0x30] sm:$0xf]
        %v1474 = vld [vmem:[#allocation10 + $0x34] sm:$0xf]
        %v1475 = vld [vmem:[#allocation10 + $0x38] sm:$0xf]
        %v1476 = vld [vmem:[#allocation10 + $0x3c] sm:$0xf]
        %v1477 = vld [vmem:[%s10] sm:$0x1]
        %v1479 = vperm.slane %v1477, 0
        %v1497 = vunpack.c.l.b16 %v1461
        %v1498 = vunpack.c.l.b16 %v1462
        %v1499 = vunpack.c.l.b16 %v1463
        %v1500 = vunpack.c.l.b16 %v1464
        %v1501 = vunpack.c.l.b16 %v1465
        %v1502 = vunpack.c.l.b16 %v1466
        %v1503 = vunpack.c.l.b16 %v1467
        %v1504 = vunpack.c.l.b16 %v1468
        %v1505 = vunpack.c.l.b16 %v1469
        %v1506 = vunpack.c.l.b16 %v1470
        %v1507 = vunpack.c.l.b16 %v1471
        %v1508 = vunpack.c.l.b16 %v1472
        %v1509 = vunpack.c.l.b16 %v1473
        %v1510 = vunpack.c.l.b16 %v1474
        %v1511 = vunpack.c.l.b16 %v1475
        %v1512 = vunpack.c.l.b16 %v1476
        %v1513 = vpack.c.b16 %v1498, %v1497
        %v1514 = vpack.c.b16 %v1500, %v1499
        %v1515 = vpack.c.b16 %v1502, %v1501
        %v1516 = vpack.c.b16 %v1504, %v1503
        %v1517 = vpack.c.b16 %v1506, %v1505
        %v1518 = vpack.c.b16 %v1508, %v1507
        %v1519 = vpack.c.b16 %v1510, %v1509
        %v1520 = vpack.c.b16 %v1512, %v1511
        %1529 = vmatpush.bf16.msra.mxu0 %v1520
        %1530 = vmatpush.bf16.msra.mxu0 %v1519
        %1531 = vmatpush.bf16.msra.mxu0 %v1518
        %1532 = vmatpush.bf16.msra.mxu0 %v1517
        %1533 = vmatpush.bf16.msra.mxu0 %v1516
        %1534 = vmatpush.bf16.msra.mxu0 %v1515
        %1535 = vmatpush.bf16.msra.mxu0 %v1514
        %1536 = vmatpush.bf16.msra.mxu0 %v1513
        %1537 = vmatmul.bf16.gmra.mxu0 %v1460
        %v1538 = vpop.f32.mrf.mxu0
        %v1539 = vadd.f32 %v1479, %v1538
        %v1540 = vpop.f32.mrf.mxu0
        %1541 = vdwg.mxu0
        %v1542 = vadd.f32 %v903, %v1539
        %v1543 = vld [vmem:[%s11] sm:$0x1]
        %v1544 = vld [vmem:[%s12] sm:$0x1]
        %1545 = vadd.xlane.f32.xlu0 %v1542
        %v1546 = vpop.xlane.xlu0 %1545
        %v1547 = vmul.f32 %v1546, %v917
        %v1548 = vsub.f32 %v1542, %v1547
        %v1549 = vmul.f32 %v1548, %v1548
        %1550 = vadd.xlane.f32.xlu0 %v1549
        %v1551 = vpop.xlane.xlu0 %1550
        %v1552 = vmul.f32 %v1551, %v917
        %v1553 = vadd.f32 %v1552, 1e-06
        %v1554 = vrsqrt.pop %v1553
        %v1555 = vmul.f32 %v1554, %v1553
        %v1556 = vmul.f32 %v1555, %v1554
        %v1557 = vmul.f32 0.5, %v1556
        %v1558 = vsub.f32 1.5, %v1557
        %v1559 = vmul.f32 %v1554, %v1558
        %vm1560 = vweird.f32 %v1553
        %vm1561 = vweird.f32 %v1554
        %vm1562 = vmor %vm1560, %vm1561
        %v1563 = vsel %vm1562, %v1554, %v1559
        %v1564 = vmul.f32 %v1548, %v1563
        %v1566 = vperm.slane %v1543, 0
        %v1568 = vmul.f32 %v1564, %v1566
        %v1570 = vperm.slane %v1544, 0
        %v1572 = vadd.f32 %v1568, %v1570
        %v1573 = vpack.c.bf16 %v1572, %v1572
        %v1574 = vld [vmem:[#allocation11] sm:$0xff]
        %v1575 = vld [vmem:[#allocation11 + $0x8] sm:$0xff]
        %v1576 = vld [vmem:[#allocation11 + $0x10] sm:$0xff]
        %v1577 = vld [vmem:[#allocation11 + $0x18] sm:$0xff]
        %v1578 = vld [vmem:[#allocation11 + $0x20] sm:$0xff]
        %v1579 = vld [vmem:[#allocation11 + $0x28] sm:$0xff]
        %v1580 = vld [vmem:[#allocation11 + $0x30] sm:$0xff]
        %v1581 = vld [vmem:[#allocation11 + $0x38] sm:$0xff]
        %v1582 = vld [vmem:[#allocation11 + $0x40] sm:$0xff]
        %v1583 = vld [vmem:[#allocation11 + $0x48] sm:$0xff]
        %v1584 = vld [vmem:[#allocation11 + $0x50] sm:$0xff]
        %v1585 = vld [vmem:[#allocation11 + $0x58] sm:$0xff]
        %v1586 = vld [vmem:[#allocation11 + $0x60] sm:$0xff]
        %v1587 = vld [vmem:[#allocation11 + $0x68] sm:$0xff]
        %v1588 = vld [vmem:[#allocation11 + $0x70] sm:$0xff]
        %v1589 = vld [vmem:[#allocation11 + $0x78] sm:$0xff]
        %v1590 = vld [vmem:[%s14] sm:$0x3]
        %v1592 = vperm.slane %v1590, 0
        %v1593 = vperm.slane %v1590, 1
        %v1612 = vunpack.c.l.b16 %v1574
        %v1613 = vunpack.c.h.b16 %v1574
        %v1614 = vunpack.c.l.b16 %v1575
        %v1615 = vunpack.c.h.b16 %v1575
        %v1616 = vunpack.c.l.b16 %v1576
        %v1617 = vunpack.c.h.b16 %v1576
        %v1618 = vunpack.c.l.b16 %v1577
        %v1619 = vunpack.c.h.b16 %v1577
        %v1620 = vunpack.c.l.b16 %v1578
        %v1621 = vunpack.c.h.b16 %v1578
        %v1622 = vunpack.c.l.b16 %v1579
        %v1623 = vunpack.c.h.b16 %v1579
        %v1624 = vunpack.c.l.b16 %v1580
        %v1625 = vunpack.c.h.b16 %v1580
        %v1626 = vunpack.c.l.b16 %v1581
        %v1627 = vunpack.c.h.b16 %v1581
        %v1628 = vunpack.c.l.b16 %v1582
        %v1629 = vunpack.c.h.b16 %v1582
        %v1630 = vunpack.c.l.b16 %v1583
        %v1631 = vunpack.c.h.b16 %v1583
        %v1632 = vunpack.c.l.b16 %v1584
        %v1633 = vunpack.c.h.b16 %v1584
        %v1634 = vunpack.c.l.b16 %v1585
        %v1635 = vunpack.c.h.b16 %v1585
        %v1636 = vunpack.c.l.b16 %v1586
        %v1637 = vunpack.c.h.b16 %v1586
        %v1638 = vunpack.c.l.b16 %v1587
        %v1639 = vunpack.c.h.b16 %v1587
        %v1640 = vunpack.c.l.b16 %v1588
        %v1641 = vunpack.c.h.b16 %v1588
        %v1642 = vunpack.c.l.b16 %v1589
        %v1643 = vunpack.c.h.b16 %v1589
        %v1644 = vpack.c.b16 %v1614, %v1612
        %v1645 = vpack.c.b16 %v1615, %v1613
        %v1646 = vpack.c.b16 %v1618, %v1616
        %v1647 = vpack.c.b16 %v1619, %v1617
        %v1648 = vpack.c.b16 %v1622, %v1620
        %v1649 = vpack.c.b16 %v1623, %v1621
        %v1650 = vpack.c.b16 %v1626, %v1624
        %v1651 = vpack.c.b16 %v1627, %v1625
        %v1652 = vpack.c.b16 %v1630, %v1628
        %v1653 = vpack.c.b16 %v1631, %v1629
        %v1654 = vpack.c.b16 %v1634, %v1632
        %v1655 = vpack.c.b16 %v1635, %v1633
        %v1656 = vpack.c.b16 %v1638, %v1636
        %v1657 = vpack.c.b16 %v1639, %v1637
        %v1658 = vpack.c.b16 %v1642, %v1640
        %v1659 = vpack.c.b16 %v1643, %v1641
        %1676 = vmatpush.bf16.msra.mxu0 %v1658
        %1677 = vmatpush.bf16.msra.mxu0 %v1656
        %1678 = vmatpush.bf16.msra.mxu0 %v1654
        %1679 = vmatpush.bf16.msra.mxu0 %v1652
        %1680 = vmatpush.bf16.msra.mxu0 %v1650
        %1681 = vmatpush.bf16.msra.mxu0 %v1648
        %1682 = vmatpush.bf16.msra.mxu0 %v1646
        %1683 = vmatpush.bf16.msra.mxu0 %v1644
        %1684 = vmatmul.bf16.gmra.mxu0 %v1573
        %v1685 = vpop.f32.mrf.mxu0
        %v1686 = vadd.f32 %v1592, %v1685
        %v1687 = vpop.f32.mrf.mxu0
        %1688 = vdwg.mxu0
        %1689 = vmatpush.bf16.msra.mxu0 %v1659
        %1690 = vmatpush.bf16.msra.mxu0 %v1657
        %1691 = vmatpush.bf16.msra.mxu0 %v1655
        %1692 = vmatpush.bf16.msra.mxu0 %v1653
        %1693 = vmatpush.bf16.msra.mxu0 %v1651
        %1694 = vmatpush.bf16.msra.mxu0 %v1649
        %1695 = vmatpush.bf16.msra.mxu0 %v1647
        %1696 = vmatpush.bf16.msra.mxu0 %v1645
        %1697 = vmatmul.bf16.gmra.mxu0 %v1573
        %v1698 = vpop.f32.mrf.mxu0
        %v1699 = vadd.f32 %v1593, %v1698
        %v1700 = vpop.f32.mrf.mxu0
        %1701 = vdwg.mxu0
        %v1702 = vmax.f32 %v1686, 0.0
        %v1703 = vmax.f32 %v1699, 0.0
        %v1704 = vpack.c.bf16 %v1702, %v1702
        %v1705 = vpack.c.bf16 %v1703, %v1703
        %v1706 = vld [vmem:[#allocation13] sm:$0xf]
        %v1707 = vld [vmem:[#allocation13 + $0x4] sm:$0xf]
        %v1708 = vld [vmem:[#allocation13 + $0x8] sm:$0xf]
        %v1709 = vld [vmem:[#allocation13 + $0xc] sm:$0xf]
        %v1710 = vld [vmem:[#allocation13 + $0x10] sm:$0xf]
        %v1711 = vld [vmem:[#allocation13 + $0x14] sm:$0xf]
        %v1712 = vld [vmem:[#allocation13 + $0x18] sm:$0xf]
        %v1713 = vld [vmem:[#allocation13 + $0x1c] sm:$0xf]
        %v1714 = vld [vmem:[#allocation13 + $0x20] sm:$0xf]
        %v1715 = vld [vmem:[#allocation13 + $0x24] sm:$0xf]
        %v1716 = vld [vmem:[#allocation13 + $0x28] sm:$0xf]
        %v1717 = vld [vmem:[#allocation13 + $0x2c] sm:$0xf]
        %v1718 = vld [vmem:[#allocation13 + $0x30] sm:$0xf]
        %v1719 = vld [vmem:[#allocation13 + $0x34] sm:$0xf]
        %v1720 = vld [vmem:[#allocation13 + $0x38] sm:$0xf]
        %v1721 = vld [vmem:[#allocation13 + $0x3c] sm:$0xf]
        %v1722 = vld [vmem:[#allocation13 + $0x40] sm:$0xf]
        %v1723 = vld [vmem:[#allocation13 + $0x44] sm:$0xf]
        %v1724 = vld [vmem:[#allocation13 + $0x48] sm:$0xf]
        %v1725 = vld [vmem:[#allocation13 + $0x4c] sm:$0xf]
        %v1726 = vld [vmem:[#allocation13 + $0x50] sm:$0xf]
        %v1727 = vld [vmem:[#allocation13 + $0x54] sm:$0xf]
        %v1728 = vld [vmem:[#allocation13 + $0x58] sm:$0xf]
        %v1729 = vld [vmem:[#allocation13 + $0x5c] sm:$0xf]
        %v1730 = vld [vmem:[#allocation13 + $0x60] sm:$0xf]
        %v1731 = vld [vmem:[#allocation13 + $0x64] sm:$0xf]
        %v1732 = vld [vmem:[#allocation13 + $0x68] sm:$0xf]
        %v1733 = vld [vmem:[#allocation13 + $0x6c] sm:$0xf]
        %v1734 = vld [vmem:[#allocation13 + $0x70] sm:$0xf]
        %v1735 = vld [vmem:[#allocation13 + $0x74] sm:$0xf]
        %v1736 = vld [vmem:[#allocation13 + $0x78] sm:$0xf]
        %v1737 = vld [vmem:[#allocation13 + $0x7c] sm:$0xf]
        %v1738 = vld [vmem:[%s16] sm:$0x1]
        %v1740 = vperm.slane %v1738, 0
        %v1774 = vunpack.c.l.b16 %v1706
        %v1775 = vunpack.c.l.b16 %v1707
        %v1776 = vunpack.c.l.b16 %v1708
        %v1777 = vunpack.c.l.b16 %v1709
        %v1778 = vunpack.c.l.b16 %v1710
        %v1779 = vunpack.c.l.b16 %v1711
        %v1780 = vunpack.c.l.b16 %v1712
        %v1781 = vunpack.c.l.b16 %v1713
        %v1782 = vunpack.c.l.b16 %v1714
        %v1783 = vunpack.c.l.b16 %v1715
        %v1784 = vunpack.c.l.b16 %v1716
        %v1785 = vunpack.c.l.b16 %v1717
        %v1786 = vunpack.c.l.b16 %v1718
        %v1787 = vunpack.c.l.b16 %v1719
        %v1788 = vunpack.c.l.b16 %v1720
        %v1789 = vunpack.c.l.b16 %v1721
        %v1790 = vunpack.c.l.b16 %v1722
        %v1791 = vunpack.c.l.b16 %v1723
        %v1792 = vunpack.c.l.b16 %v1724
        %v1793 = vunpack.c.l.b16 %v1725
        %v1794 = vunpack.c.l.b16 %v1726
        %v1795 = vunpack.c.l.b16 %v1727
        %v1796 = vunpack.c.l.b16 %v1728
        %v1797 = vunpack.c.l.b16 %v1729
        %v1798 = vunpack.c.l.b16 %v1730
        %v1799 = vunpack.c.l.b16 %v1731
        %v1800 = vunpack.c.l.b16 %v1732
        %v1801 = vunpack.c.l.b16 %v1733
        %v1802 = vunpack.c.l.b16 %v1734
        %v1803 = vunpack.c.l.b16 %v1735
        %v1804 = vunpack.c.l.b16 %v1736
        %v1805 = vunpack.c.l.b16 %v1737
        %v1806 = vpack.c.b16 %v1775, %v1774
        %v1807 = vpack.c.b16 %v1777, %v1776
        %v1808 = vpack.c.b16 %v1779, %v1778
        %v1809 = vpack.c.b16 %v1781, %v1780
        %v1810 = vpack.c.b16 %v1783, %v1782
        %v1811 = vpack.c.b16 %v1785, %v1784
        %v1812 = vpack.c.b16 %v1787, %v1786
        %v1813 = vpack.c.b16 %v1789, %v1788
        %v1814 = vpack.c.b16 %v1791, %v1790
        %v1815 = vpack.c.b16 %v1793, %v1792
        %v1816 = vpack.c.b16 %v1795, %v1794
        %v1817 = vpack.c.b16 %v1797, %v1796
        %v1818 = vpack.c.b16 %v1799, %v1798
        %v1819 = vpack.c.b16 %v1801, %v1800
        %v1820 = vpack.c.b16 %v1803, %v1802
        %v1821 = vpack.c.b16 %v1805, %v1804
        %1838 = vmatpush.bf16.msra.mxu0 %v1813
        %1839 = vmatpush.bf16.msra.mxu0 %v1812
        %1840 = vmatpush.bf16.msra.mxu0 %v1811
        %1841 = vmatpush.bf16.msra.mxu0 %v1810
        %1842 = vmatpush.bf16.msra.mxu0 %v1809
        %1843 = vmatpush.bf16.msra.mxu0 %v1808
        %1844 = vmatpush.bf16.msra.mxu0 %v1807
        %1845 = vmatpush.bf16.msra.mxu0 %v1806
        %1846 = vmatmul.bf16.gmra.mxu0 %v1704
        %v1847 = vpop.f32.mrf.mxu0
        %v1848 = vadd.f32 %v1740, %v1847
        %v1849 = vpop.f32.mrf.mxu0
        %1850 = vdwg.mxu0
        %1851 = vmatpush.bf16.msra.mxu0 %v1821
        %1852 = vmatpush.bf16.msra.mxu0 %v1820
        %1853 = vmatpush.bf16.msra.mxu0 %v1819
        %1854 = vmatpush.bf16.msra.mxu0 %v1818
        %1855 = vmatpush.bf16.msra.mxu0 %v1817
        %1856 = vmatpush.bf16.msra.mxu0 %v1816
        %1857 = vmatpush.bf16.msra.mxu0 %v1815
        %1858 = vmatpush.bf16.msra.mxu0 %v1814
        %1859 = vmatmul.bf16.gmra.mxu0 %v1705
        %v1860 = vpop.f32.mrf.mxu0
        %v1861 = vadd.f32 %v1848, %v1860
        %v1862 = vpop.f32.mrf.mxu0
        %1863 = vdwg.mxu0
        %v1864 = vadd.f32 %v1542, %v1861
        %v1865 = vld [vmem:[%s17] sm:$0x1]
        %v1866 = vld [vmem:[%s18] sm:$0x1]
        %1867 = vadd.xlane.f32.xlu0 %v1864
        %v1868 = vpop.xlane.xlu0 %1867
        %v1869 = vmul.f32 %v1868, %v917
        %v1870 = vsub.f32 %v1864, %v1869
        %v1871 = vmul.f32 %v1870, %v1870
        %1872 = vadd.xlane.f32.xlu0 %v1871
        %v1873 = vpop.xlane.xlu0 %1872
        %v1874 = vmul.f32 %v1873, %v917
        %v1875 = vadd.f32 %v1874, 1e-06
        %v1876 = vrsqrt.pop %v1875
        %v1877 = vmul.f32 %v1876, %v1875
        %v1878 = vmul.f32 %v1877, %v1876
        %v1879 = vmul.f32 0.5, %v1878
        %v1880 = vsub.f32 1.5, %v1879
        %v1881 = vmul.f32 %v1876, %v1880
        %vm1882 = vweird.f32 %v1875
        %vm1883 = vweird.f32 %v1876
        %vm1884 = vmor %vm1882, %vm1883
        %v1885 = vsel %vm1884, %v1876, %v1881
        %v1886 = vmul.f32 %v1870, %v1885
        %v1888 = vperm.slane %v1865, 0
        %v1890 = vmul.f32 %v1886, %v1888
        %v1892 = vperm.slane %v1866, 0
        %v1894 = vadd.f32 %v1890, %v1892
        %v1895 = vpack.c.bf16 %v1894, %v1894
        %v1896 = vld [vmem:[%s19] sm:$0xf]
        %v1897 = vld [vmem:[%s19 + $0x4] sm:$0xf]
        %v1898 = vld [vmem:[%s19 + $0x8] sm:$0xf]
        %v1899 = vld [vmem:[%s19 + $0xc] sm:$0xf]
        %v1900 = vld [vmem:[%s19 + $0x10] sm:$0xf]
        %v1901 = vld [vmem:[%s19 + $0x14] sm:$0xf]
        %v1902 = vld [vmem:[%s19 + $0x18] sm:$0xf]
        %v1903 = vld [vmem:[%s19 + $0x1c] sm:$0xf]
        %v1904 = vld [vmem:[%s19 + $0x20] sm:$0xf]
        %v1905 = vld [vmem:[%s19 + $0x24] sm:$0xf]
        %v1906 = vld [vmem:[%s19 + $0x28] sm:$0xf]
        %v1907 = vld [vmem:[%s19 + $0x2c] sm:$0xf]
        %v1908 = vld [vmem:[%s19 + $0x30] sm:$0xf]
        %v1909 = vld [vmem:[%s19 + $0x34] sm:$0xf]
        %v1910 = vld [vmem:[%s19 + $0x38] sm:$0xf]
        %v1911 = vld [vmem:[%s19 + $0x3c] sm:$0xf]
        %v1912 = vld [vmem:[%s20] sm:$0x1]
        %v1914 = vperm.slane %v1912, 0
        %v1932 = vunpack.c.l.b16 %v1896
        %v1933 = vunpack.c.l.b16 %v1897
        %v1934 = vunpack.c.l.b16 %v1898
        %v1935 = vunpack.c.l.b16 %v1899
        %v1936 = vunpack.c.l.b16 %v1900
        %v1937 = vunpack.c.l.b16 %v1901
        %v1938 = vunpack.c.l.b16 %v1902
        %v1939 = vunpack.c.l.b16 %v1903
        %v1940 = vunpack.c.l.b16 %v1904
        %v1941 = vunpack.c.l.b16 %v1905
        %v1942 = vunpack.c.l.b16 %v1906
        %v1943 = vunpack.c.l.b16 %v1907
        %v1944 = vunpack.c.l.b16 %v1908
        %v1945 = vunpack.c.l.b16 %v1909
        %v1946 = vunpack.c.l.b16 %v1910
        %v1947 = vunpack.c.l.b16 %v1911
        %v1948 = vpack.c.b16 %v1933, %v1932
        %v1949 = vpack.c.b16 %v1935, %v1934
        %v1950 = vpack.c.b16 %v1937, %v1936
        %v1951 = vpack.c.b16 %v1939, %v1938
        %v1952 = vpack.c.b16 %v1941, %v1940
        %v1953 = vpack.c.b16 %v1943, %v1942
        %v1954 = vpack.c.b16 %v1945, %v1944
        %v1955 = vpack.c.b16 %v1947, %v1946
        %1964 = vmatpush.bf16.msra.mxu0 %v1955
        %1965 = vmatpush.bf16.msra.mxu0 %v1954
        %1966 = vmatpush.bf16.msra.mxu0 %v1953
        %1967 = vmatpush.bf16.msra.mxu0 %v1952
        %1968 = vmatpush.bf16.msra.mxu0 %v1951
        %1969 = vmatpush.bf16.msra.mxu0 %v1950
        %1970 = vmatpush.bf16.msra.mxu0 %v1949
        %1971 = vmatpush.bf16.msra.mxu0 %v1948
        %1972 = vmatmul.bf16.gmra.mxu0 %v1895
        %v1973 = vpop.f32.mrf.mxu0
        %v1974 = vadd.f32 %v1914, %v1973
        %v1975 = vpop.f32.mrf.mxu0
        %1976 = vdwg.mxu0
        %v1977 = vmax.f32 %v1974, 0.0
        %v1978 = vpack.c.bf16 %v1977, %v1977
        %v1979 = vld [vmem:[#allocation14] sm:$0xf]
        %v1980 = vld [vmem:[#allocation14 + $0x4] sm:$0xf]
        %v1981 = vld [vmem:[#allocation14 + $0x8] sm:$0xf]
        %v1982 = vld [vmem:[#allocation14 + $0xc] sm:$0xf]
        %v1983 = vld [vmem:[#allocation14 + $0x10] sm:$0xf]
        %v1984 = vld [vmem:[#allocation14 + $0x14] sm:$0xf]
        %v1985 = vld [vmem:[#allocation14 + $0x18] sm:$0xf]
        %v1986 = vld [vmem:[#allocation14 + $0x1c] sm:$0xf]
        %v1987 = vld [vmem:[%s22] sm:$0x1]
        %v1989 = vperm.slane %v1987, 0
        %v1999 = vunpack.c.l.b16 %v1979
        %v2000 = vunpack.c.l.b16 %v1980
        %v2001 = vunpack.c.l.b16 %v1981
        %v2002 = vunpack.c.l.b16 %v1982
        %v2003 = vunpack.c.l.b16 %v1983
        %v2004 = vunpack.c.l.b16 %v1984
        %v2005 = vunpack.c.l.b16 %v1985
        %v2006 = vunpack.c.l.b16 %v1986
        %v2007 = vpack.c.b16 %v2000, %v1999
        %v2008 = vpack.c.b16 %v2002, %v2001
        %v2009 = vpack.c.b16 %v2004, %v2003
        %v2010 = vpack.c.b16 %v2006, %v2005
        %v2016 = vsel %vm1456, %v1978, 0
        %2018 = vmatpush.bf16.msra.mxu0 0
        %2019 = vmatpush.bf16.msra.mxu0 0
        %2020 = vmatpush.bf16.msra.mxu0 0
        %2021 = vmatpush.bf16.msra.mxu0 0
        %2022 = vmatpush.bf16.msra.mxu0 %v2010
        %2023 = vmatpush.bf16.msra.mxu0 %v2009
        %2024 = vmatpush.bf16.msra.mxu0 %v2008
        %2025 = vmatpush.bf16.msra.mxu0 %v2007
        %2026 = vmatmul.bf16.gmra.mxu0 %v2016
        %v2027 = vpop.f32.mrf.mxu0
        %v2028 = vadd.f32 %v1989, %v2027
        %v2029 = vpop.f32.mrf.mxu0
        %2030 = vdwg.mxu0
        %v2031 = vadd.f32 %v1864, %v2028
        %2032 = vst [vmem:[%s890] sm:$0xff] %v2031
        %s2033 = sand.u32 %s566, 1
        %s2034 = scalar_lea.sflag [#allocation4], %s2033
        %s2035 = sand.u32 %s566, 1
        %s2036 = smul.addr %s2035, 8
        %s2037 = scalar_lea.vmem [#allocation16], %s2036
        // Predicated region
        $region145: #{tpu_custom_call.1} parent=111 // pred_check
          %p2038 = pneg %p576
        $region146: #{tpu_custom_call.1} parent=111 // pred_check_branch
          %2040 = sbr.rel (%p2038) target = $region148
        $region147: #{tpu_custom_call.1} parent=111 // pred_region
          %2042 = vsyncadd %s2034, 0
          %s2043 = smul.addr %s48, 2
          %s2044 = sadd.s32 %s49, %s2043
          %s2045 = smul.addr %s2044, 8
          %s2046 = scalar_lea.hbm %s23, %s2045
          %s2048 = sshll.u32 %s2037, 4
          %s2049 = int_to_ptr.vmem [resolvable:$true] %s2048
          %s2050 = sshll.u32 %s2046, 4
          %s2051 = int_to_ptr.hbm [resolvable:$true] %s2050
          %2053 = dma.vmem_to_hbm [thread:$0]  %s2049, 128, %s2051, %s2034
        $region148: #{tpu_custom_call.1} parent=111 // pred_fallthru
          _
      $region112: #{tpu_custom_call.1} parent=5 // pred_fallthru
        _
      %p2054 = scmp.le.s32.totalorder 2, %s39
      // Predicated region
      $region149: #{tpu_custom_call.1} parent=5 // pred_check
        %p2055 = pneg %p2054
      $region150: #{tpu_custom_call.1} parent=5 // pred_check_branch
        %2057 = sbr.rel (%p2055) target = $region152
      $region151: #{tpu_custom_call.1} parent=5 // pred_region
        %s2058 = ssub.s32 %s39, 2
        // Predicated region
        $region153: #{tpu_custom_call.1} parent=151 // pred_check
          %p2059 = pneg %p582
        $region154: #{tpu_custom_call.1} parent=151 // pred_check_branch
          %2061 = sbr.rel (%p2059) target = $region156
        $region155: #{tpu_custom_call.1} parent=151 // pred_region
          %s2062 = sand.u32 %s567, 1
          %s2063 = scalar_lea.sflag [#allocation4], %s2062
          %s2064 = sand.u32 %s567, 1
          %s2065 = smul.addr %s2064, 8
          %s2066 = scalar_lea.vmem [#allocation16], %s2065
          %2068 = dma.done %s2063, 128
        $region156: #{tpu_custom_call.1} parent=151 // pred_fallthru
          _
      $region152: #{tpu_custom_call.1} parent=5 // pred_fallthru
        _
    $region6: #{tpu_custom_call.1} parent=1 // loop_footer
      %s43 = sadd.s32 1, %s39
    $region7: #{tpu_custom_call.1} parent=1 // loop_footer_branch
      %38 = sbr.rel target = $region3
    $region8: #{tpu_custom_call.1} parent=1 // loop_exit
      _
    %2069 = vsyncpa [#allocation3], 1
    %s2070 = scalar_lea.sflag [#allocation3], 1
    %2071 = vsyncpa %s2070, 1
    %2072 = vsyncpa [#allocation6], 1
    %2073 = vsyncpa [#allocation9], 1
    %2074 = vsyncpa [#allocation12], 1
    %2075 = vsyncpa [#allocation15], 1
    %2076 = vsyncpa [#allocation4], 1
    %s2077 = scalar_lea.sflag [#allocation4], 1
    %2078 = vsyncpa %s2077, 1

</llo_original>
